<compile_context>
chip_gen: v7x
topology: tpu7x:2x2x1
jax: 0.10.0
libtpu: 0.0.40
codegen_flags: <defaults>
</compile_context>

<pallas_src>
import jax
import jax.numpy as jnp
from jax.experimental import pallas as pl
from jax.experimental.pallas import tpu as pltpu

D_IN, D_H1, D_H2, D_H3, D_OUT = 784, 512, 256, 128, 10
D_OUT_PAD = 128  # lane-dense padded width used for the final matmul (compute only)


def _round_up(x, m):
    return ((x + m - 1) // m) * m


def _choose_bm(B, requested=None):
    """Batch-tile size: MXU-aligned, capped at 2048 (v7x VMEM), >= 2 tiles when possible."""
    if requested is not None:
        return requested
    if B < 512:
        return B                                  # one full tile (block == array dim is always legal)
    bm = _round_up(-(-B // 2), 256)               # >= 2 tiles -> both v7x TensorCores busy
    return min(bm, 2048)                          # cap: keeps working set well under v7x VMEM


def mlp_kernel(x_ref,
               w1_ref, b1_ref,
               w2_ref, b2_ref,
               w3_ref, b3_ref,
               w4_ref, b4_ref,
               o_ref):
    cdt = w1_ref.dtype  # compute dtype (bf16 fast path / f32 exact path)

    # In-kernel cast: VPU work hidden under the MXU; avoids a separate wrapper HBM pass.
    x = x_ref[...].astype(cdt)

    h1 = jnp.dot(x, w1_ref[...], preferred_element_type=jnp.float32) + b1_ref[...]
    h1 = jnp.maximum(h1, 0.0).astype(cdt)   # ReLU (Dropout = identity, eval mode)

    h2 = jnp.dot(h1, w2_ref[...], preferred_element_type=jnp.float32) + b2_ref[...]
    h2 = jnp.maximum(h2, 0.0).astype(cdt)

    h3 = jnp.dot(h2, w3_ref[...], preferred_element_type=jnp.float32) + b3_ref[...]
    h3 = jnp.maximum(h3, 0.0).astype(cdt)

    # Final layer computed 128-wide (full MXU tile); only the 10 real logits are stored.
    acc = jnp.dot(h3, w4_ref[...], preferred_element_type=jnp.float32) + b4_ref[...]
    o_ref[...] = acc[:, :D_OUT]


def prepare_params(params, compute_dtype=jnp.bfloat16):
    """One-time (model-load) conversion: weights -> compute dtype, biases -> f32,
    final layer zero-padded to 128 lanes. Do NOT call per forward."""
    return {
        "w1": params["w1"].astype(compute_dtype),
        "w2": params["w2"].astype(compute_dtype),
        "w3": params["w3"].astype(compute_dtype),
        "w4": jnp.pad(params["w4"], ((0, 0), (0, D_OUT_PAD - D_OUT))).astype(compute_dtype),
        "b1": params["b1"].astype(jnp.float32),
        "b2": params["b2"].astype(jnp.float32),
        "b3": params["b3"].astype(jnp.float32),
        "b4": jnp.pad(params["b4"].astype(jnp.float32), ((0, 0), (0, D_OUT_PAD - D_OUT))),
    }


def mlp_forward(x, prepared, *, bm=None):
    """x: [B, 784] float32.  prepared: output of prepare_params().  Returns [B, 10] f32 logits."""
    B = x.shape[0]
    bm = _choose_bm(B, bm)
    n_tiles = pl.cdiv(B, bm)

    w1, w2, w3, w4 = prepared["w1"], prepared["w2"], prepared["w3"], prepared["w4"]
    b1, b2, b3, b4 = prepared["b1"], prepared["b2"], prepared["b3"], prepared["b4"]

    w_elems = D_IN * D_H1 + D_H1 * D_H2 + D_H2 * D_H3 + D_H3 * D_OUT_PAD
    itemsize = jnp.dtype(w1.dtype).itemsize
    cost = pl.CostEstimate(
        flops=2 * B * w_elems,
        transcendentals=0,
        bytes_accessed=(B * D_IN * 4                      # x (f32, read directly)
                        + w_elems * itemsize               # resident weights
                        + (D_H1 + D_H2 + D_H3 + D_OUT_PAD) * 4  # biases (f32)
                        + B * D_OUT * 4))                  # logits (f32, 10-wide)

    # Weights/biases: whole-array resident blocks, constant index_map.
    full = lambda shape: pl.BlockSpec(shape, lambda i: (0, 0))

    out = pl.pallas_call(
        mlp_kernel,
        out_shape=jax.ShapeDtypeStruct((B, D_OUT), jnp.float32),
        grid_spec=pltpu.PrefetchScalarGridSpec(
            num_scalar_prefetch=0,
            grid=(n_tiles,),
            in_specs=[
                pl.BlockSpec((bm, D_IN), lambda i: (i, 0)),   # x tiled over batch (f32)
                full((D_IN, D_H1)), full((1, D_H1)),
                full((D_H1, D_H2)), full((1, D_H2)),
                full((D_H2, D_H3)), full((1, D_H3)),
                full((D_H3, D_OUT_PAD)), full((1, D_OUT_PAD)),
            ],
            out_specs=pl.BlockSpec((bm, D_OUT), lambda i: (i, 0)),
        ),
        compiler_params=pltpu.CompilerParams(
            dimension_semantics=("parallel",),      # shards batch tiles across TCs on v7x
            vmem_limit_bytes=40 * 1024 * 1024,      # bm=2048 working set (~25 MB) > v5e's 16 MiB default
        ),
        cost_estimate=cost,
    )(x, w1, b1, w2, b2, w3, b3, w4, b4)

    return out


def init_params(key):
    """Deterministic init matching PyTorch nn.Linear default: U(-1/sqrt(fan_in), +1/sqrt(fan_in))."""
    dims = [(D_IN, D_H1), (D_H1, D_H2), (D_H2, D_H3), (D_H3, D_OUT)]
    params = {}
    for idx, (fan_in, fan_out) in enumerate(dims, start=1):
        key, kw, kb = jax.random.split(key, 3)
        bound = 1.0 / (fan_in ** 0.5)
        params[f"w{idx}"] = jax.random.uniform(
            kw, (fan_in, fan_out), jnp.float32, minval=-bound, maxval=bound)
        params[f"b{idx}"] = jax.random.uniform(
            kb, (1, fan_out), jnp.float32, minval=-bound, maxval=bound)
    return params


def mlp_reference(x, params):
    h = x
    for i in range(1, 5):
        h = h @ params[f"w{i}"] + params[f"b{i}"]
        if i < 4:
            h = jnp.maximum(h, 0.0)
    return h


if __name__ == "__main__":
    key = jax.random.PRNGKey(0)
    key, kx, kx2 = jax.random.split(key, 3)
    params = init_params(key)

    # Case 1: small batch, single full tile.
    B = 32
    x = jax.random.normal(kx, (B, D_IN), jnp.float32)
    ref = mlp_reference(x, params)

    # Exact-precision path (f32 everywhere): tight check.
    p_f32 = prepare_params(params, compute_dtype=jnp.float32)
    out_f32 = jax.block_until_ready(mlp_forward(x, p_f32))
    assert out_f32.shape == (B, D_OUT)
    assert jnp.allclose(out_f32, ref, atol=1e-4, rtol=1e-4), "f32 mismatch vs pure-JAX reference"

    # Default fast path (bf16 weights/activations, f32 accumulation): loose check.
    p_bf16 = prepare_params(params)
    out_bf16 = jax.block_until_ready(mlp_forward(x, p_bf16))
    assert out_bf16.shape == (B, D_OUT)
    assert jnp.allclose(out_bf16, ref, atol=5e-2, rtol=5e-2), "bf16 mismatch vs pure-JAX reference"

    # Case 2: ragged batch, 2 tiles with a partial last block (no wrapper padding).
    B2 = 300
    x2 = jax.random.normal(kx2, (B2, D_IN), jnp.float32)
    ref2 = mlp_reference(x2, params)
    out2 = jax.block_until_ready(mlp_forward(x2, p_bf16, bm=256))
    assert out2.shape == (B2, D_OUT)
    assert jnp.allclose(out2, ref2, atol=5e-2, rtol=5e-2), "ragged-batch mismatch vs reference"

    print("KERNEL_OK")
</pallas_src>

<mosaic_0001>
module attributes {stable_mosaic.version = 11 : i64} {
  func.func @mlp_kernel(%arg0: i32, %arg1: memref<32x784xf32, #tpu.memory_space<vmem>>, %arg2: memref<784x512xf32, #tpu.memory_space<vmem>>, %arg3: memref<1x512xf32, #tpu.memory_space<vmem>>, %arg4: memref<512x256xf32, #tpu.memory_space<vmem>>, %arg5: memref<1x256xf32, #tpu.memory_space<vmem>>, %arg6: memref<256x128xf32, #tpu.memory_space<vmem>>, %arg7: memref<1x128xf32, #tpu.memory_space<vmem>>, %arg8: memref<128x128xf32, #tpu.memory_space<vmem>>, %arg9: memref<1x128xf32, #tpu.memory_space<vmem>>, %arg10: memref<32x10xf32, #tpu.memory_space<vmem>>) attributes {dimension_semantics = [#tpu.dimension_semantics<parallel>], iteration_bounds = array<i64: 1>, scalar_prefetch = 0 : i64, scratch_operands = 0 : i64, tpu.core_type = #tpu.core_type<tc>, window_params = [{transform_indices = @transform_0, window_bounds = array<i64: 32, 784>}, {pipeline_mode = #tpu.pipeline_mode<synchronous>, transform_indices = @transform_1, window_bounds = array<i64: 784, 512>}, {pipeline_mode = #tpu.pipeline_mode<synchronous>, transform_indices = @transform_2, window_bounds = array<i64: 1, 512>}, {pipeline_mode = #tpu.pipeline_mode<synchronous>, transform_indices = @transform_3, window_bounds = array<i64: 512, 256>}, {pipeline_mode = #tpu.pipeline_mode<synchronous>, transform_indices = @transform_4, window_bounds = array<i64: 1, 256>}, {pipeline_mode = #tpu.pipeline_mode<synchronous>, transform_indices = @transform_5, window_bounds = array<i64: 256, 128>}, {pipeline_mode = #tpu.pipeline_mode<synchronous>, transform_indices = @transform_6, window_bounds = array<i64: 1, 128>}, {pipeline_mode = #tpu.pipeline_mode<synchronous>, transform_indices = @transform_7, window_bounds = array<i64: 128, 128>}, {pipeline_mode = #tpu.pipeline_mode<synchronous>, transform_indices = @transform_8, window_bounds = array<i64: 1, 128>}, {transform_indices = @transform_9, window_bounds = array<i64: 32, 10>}]} {
    %c0 = arith.constant 0 : index
    %c0_0 = arith.constant 0 : index
    %0 = vector.load %arg1[%c0, %c0_0] : memref<32x784xf32, #tpu.memory_space<vmem>>, vector<32x784xf32>
    %c0_1 = arith.constant 0 : index
    %c0_2 = arith.constant 0 : index
    %1 = vector.load %arg2[%c0_1, %c0_2] : memref<784x512xf32, #tpu.memory_space<vmem>>, vector<784x512xf32>
    %cst = arith.constant dense<0.000000e+00> : vector<32x512xf32>
    %2 = tpu.matmul %0, %1, %cst {dimension_numbers = #tpu.dot_dimension_numbers<[1], [0], [0], [1], [0, 0, 1, 1], [], []>} : vector<32x784xf32>, vector<784x512xf32>, vector<32x512xf32> -> vector<32x512xf32>
    %c0_3 = arith.constant 0 : index
    %c0_4 = arith.constant 0 : index
    %3 = vector.load %arg3[%c0_3, %c0_4] : memref<1x512xf32, #tpu.memory_space<vmem>>, vector<1x512xf32>
    %4 = vector.broadcast %3 : vector<1x512xf32> to vector<32x512xf32>
    %5 = arith.addf %2, %4 : vector<32x512xf32>
    %cst_5 = arith.constant 0.000000e+00 : f32
    %6 = vector.broadcast %cst_5 : f32 to vector<32x512xf32>
    %7 = arith.maximumf %5, %6 : vector<32x512xf32>
    %c0_6 = arith.constant 0 : index
    %c0_7 = arith.constant 0 : index
    %8 = vector.load %arg4[%c0_6, %c0_7] : memref<512x256xf32, #tpu.memory_space<vmem>>, vector<512x256xf32>
    %cst_8 = arith.constant dense<0.000000e+00> : vector<32x256xf32>
    %9 = tpu.matmul %7, %8, %cst_8 {dimension_numbers = #tpu.dot_dimension_numbers<[1], [0], [0], [1], [0, 0, 1, 1], [], []>} : vector<32x512xf32>, vector<512x256xf32>, vector<32x256xf32> -> vector<32x256xf32>
    %c0_9 = arith.constant 0 : index
    %c0_10 = arith.constant 0 : index
    %10 = vector.load %arg5[%c0_9, %c0_10] : memref<1x256xf32, #tpu.memory_space<vmem>>, vector<1x256xf32>
    %11 = vector.broadcast %10 : vector<1x256xf32> to vector<32x256xf32>
    %12 = arith.addf %9, %11 : vector<32x256xf32>
    %cst_11 = arith.constant 0.000000e+00 : f32
    %13 = vector.broadcast %cst_11 : f32 to vector<32x256xf32>
    %14 = arith.maximumf %12, %13 : vector<32x256xf32>
    %c0_12 = arith.constant 0 : index
    %c0_13 = arith.constant 0 : index
    %15 = vector.load %arg6[%c0_12, %c0_13] : memref<256x128xf32, #tpu.memory_space<vmem>>, vector<256x128xf32>
    %cst_14 = arith.constant dense<0.000000e+00> : vector<32x128xf32>
    %16 = tpu.matmul %14, %15, %cst_14 {dimension_numbers = #tpu.dot_dimension_numbers<[1], [0], [0], [1], [0, 0, 1, 1], [], []>} : vector<32x256xf32>, vector<256x128xf32>, vector<32x128xf32> -> vector<32x128xf32>
    %c0_15 = arith.constant 0 : index
    %c0_16 = arith.constant 0 : index
    %17 = vector.load %arg7[%c0_15, %c0_16] : memref<1x128xf32, #tpu.memory_space<vmem>>, vector<1x128xf32>
    %18 = vector.broadcast %17 : vector<1x128xf32> to vector<32x128xf32>
    %19 = arith.addf %16, %18 : vector<32x128xf32>
    %cst_17 = arith.constant 0.000000e+00 : f32
    %20 = vector.broadcast %cst_17 : f32 to vector<32x128xf32>
    %21 = arith.maximumf %19, %20 : vector<32x128xf32>
    %c0_18 = arith.constant 0 : index
    %c0_19 = arith.constant 0 : index
    %22 = vector.load %arg8[%c0_18, %c0_19] : memref<128x128xf32, #tpu.memory_space<vmem>>, vector<128x128xf32>
    %cst_20 = arith.constant dense<0.000000e+00> : vector<32x128xf32>
    %23 = tpu.matmul %21, %22, %cst_20 {dimension_numbers = #tpu.dot_dimension_numbers<[1], [0], [0], [1], [0, 0, 1, 1], [], []>} : vector<32x128xf32>, vector<128x128xf32>, vector<32x128xf32> -> vector<32x128xf32>
    %c0_21 = arith.constant 0 : index
    %c0_22 = arith.constant 0 : index
    %24 = vector.load %arg9[%c0_21, %c0_22] : memref<1x128xf32, #tpu.memory_space<vmem>>, vector<1x128xf32>
    %25 = vector.broadcast %24 : vector<1x128xf32> to vector<32x128xf32>
    %26 = arith.addf %23, %25 : vector<32x128xf32>
    %27 = vector.extract_strided_slice %26 {offsets = [0, 0], sizes = [32, 10], strides = [1, 1]} : vector<32x128xf32> to vector<32x10xf32>
    %c0_23 = arith.constant 0 : index
    %c0_24 = arith.constant 0 : index
    %28 = vector.load %arg10[%c0_23, %c0_24] : memref<32x10xf32, #tpu.memory_space<vmem>>, vector<32x10xf32>
    tpu.vector_store %arg10[%c0_23, %c0_24], %27 {strides = array<i32>} : memref<32x10xf32, #tpu.memory_space<vmem>>, vector<32x10xf32>,
    return
  }
  func.func @transform_0(%arg0: i32) -> (i32, i32) {
    %c0_i32 = arith.constant 0 : i32
    %c0_i32_0 = arith.constant 0 : i32
    return %arg0, %c0_i32 : i32, i32
  }
  func.func @transform_1(%arg0: i32) -> (i32, i32) {
    %c0_i32 = arith.constant 0 : i32
    %c0_i32_0 = arith.constant 0 : i32
    %c0_i32_1 = arith.constant 0 : i32
    return %c0_i32, %c0_i32_0 : i32, i32
  }
  func.func @transform_2(%arg0: i32) -> (i32, i32) {
    %c0_i32 = arith.constant 0 : i32
    %c0_i32_0 = arith.constant 0 : i32
    %c0_i32_1 = arith.constant 0 : i32
    return %c0_i32, %c0_i32_0 : i32, i32
  }
  func.func @transform_3(%arg0: i32) -> (i32, i32) {
    %c0_i32 = arith.constant 0 : i32
    %c0_i32_0 = arith.constant 0 : i32
    %c0_i32_1 = arith.constant 0 : i32
    return %c0_i32, %c0_i32_0 : i32, i32
  }
  func.func @transform_4(%arg0: i32) -> (i32, i32) {
    %c0_i32 = arith.constant 0 : i32
    %c0_i32_0 = arith.constant 0 : i32
    %c0_i32_1 = arith.constant 0 : i32
    return %c0_i32, %c0_i32_0 : i32, i32
  }
  func.func @transform_5(%arg0: i32) -> (i32, i32) {
    %c0_i32 = arith.constant 0 : i32
    %c0_i32_0 = arith.constant 0 : i32
    %c0_i32_1 = arith.constant 0 : i32
    return %c0_i32, %c0_i32_0 : i32, i32
  }
  func.func @transform_6(%arg0: i32) -> (i32, i32) {
    %c0_i32 = arith.constant 0 : i32
    %c0_i32_0 = arith.constant 0 : i32
    %c0_i32_1 = arith.constant 0 : i32
    return %c0_i32, %c0_i32_0 : i32, i32
  }
  func.func @transform_7(%arg0: i32) -> (i32, i32) {
    %c0_i32 = arith.constant 0 : i32
    %c0_i32_0 = arith.constant 0 : i32
    %c0_i32_1 = arith.constant 0 : i32
    return %c0_i32, %c0_i32_0 : i32, i32
  }
  func.func @transform_8(%arg0: i32) -> (i32, i32) {
    %c0_i32 = arith.constant 0 : i32
    %c0_i32_0 = arith.constant 0 : i32
    %c0_i32_1 = arith.constant 0 : i32
    return %c0_i32, %c0_i32_0 : i32, i32
  }
  func.func @transform_9(%arg0: i32) -> (i32, i32) {
    %c0_i32 = arith.constant 0 : i32
    %c0_i32_0 = arith.constant 0 : i32
    return %arg0, %c0_i32 : i32, i32
  }
}

</mosaic_0001>

<llo_original>
// kernel: tpu_custom_call.1
$region0: #{tpu_custom_call.1}
  #allocation0 [shape = 'u32[]', space=smem, size = 0x4, offset = 0x4, fixed_abs, tag = 'smem constant byte address 0x4 - core index']
  #allocation1 [shape = 'u32[144,128]{1,0:T(1,128)}', space=vmem, size = 0x12000, scoped, tag = 'internal scratch']
  %s0 = inlined_call_operand.hbm [shape: f32[32,784], index: 0, kind: input, shape index: {}]
  %s1 = inlined_call_operand.hbm [shape: f32[784,512], index: 1, kind: input, shape index: {}]
  %s2 = inlined_call_operand.hbm [shape: f32[1,512], index: 2, kind: input, shape index: {}]
  %s3 = inlined_call_operand.hbm [shape: f32[512,256], index: 3, kind: input, shape index: {}]
  %s4 = inlined_call_operand.hbm [shape: f32[1,256], index: 4, kind: input, shape index: {}]
  %s5 = inlined_call_operand.hbm [shape: f32[256,128], index: 5, kind: input, shape index: {}]
  %s6 = inlined_call_operand.hbm [shape: f32[1,128], index: 6, kind: input, shape index: {}]
  %s7 = inlined_call_operand.hbm [shape: f32[128,128], index: 7, kind: input, shape index: {}]
  %s8 = inlined_call_operand.hbm [shape: f32[1,128], index: 8, kind: input, shape index: {}]
  %s9 = inlined_call_operand.vmem [shape: f32[32,10], index: 9, kind: output, shape index: {}]
  %s10 = sld [smem:[#allocation0]]
  $region82: #{tpu_custom_call.1} parent=0
    _
  %s12 = ssub.s32 1, %s10
  %s13 = scalar_select 0, %s12, %s10
  $region1: #{tpu_custom_call.1} parent=0
    #allocation2 [shape = 'u8[114688]{0}', space=vmem, size = 0x1c000, scoped, tag = 'input window, operand 0, single buffered']
    #allocation3 [shape = 's32[1]{0}', space=sflag, size = 0x4, scoped, tag = 'scoped memory for tpu_custom_call.1']
    #allocation4 [shape = 'u8[1605632]{0}', space=vmem, size = 0x188000, scoped, tag = 'input window, operand 1, single buffered']
    #allocation5 [shape = 's32[1]{0}', space=sflag, size = 0x4, scoped, tag = 'scoped memory for tpu_custom_call.1']
    #allocation6 [shape = 'u8[2048]{0}', space=vmem, size = 0x800, scoped, tag = 'input window, operand 2, single buffered']
    #allocation7 [shape = 'u8[524288]{0}', space=vmem, size = 0x80000, scoped, tag = 'input window, operand 3, single buffered']
    #allocation8 [shape = 's32[1]{0}', space=sflag, size = 0x4, scoped, tag = 'scoped memory for tpu_custom_call.1']
    #allocation9 [shape = 'u8[1024]{0}', space=vmem, size = 0x400, scoped, tag = 'input window, operand 4, single buffered']
    #allocation10 [shape = 'u8[131072]{0}', space=vmem, size = 0x20000, scoped, tag = 'input window, operand 5, single buffered']
    #allocation11 [shape = 's32[1]{0}', space=sflag, size = 0x4, scoped, tag = 'scoped memory for tpu_custom_call.1']
    #allocation12 [shape = 'u8[512]{0}', space=vmem, size = 0x400, scoped, tag = 'input window, operand 6, single buffered']
    #allocation13 [shape = 'u8[65536]{0}', space=vmem, size = 0x10000, scoped, tag = 'input window, operand 7, single buffered']
    #allocation14 [shape = 's32[1]{0}', space=sflag, size = 0x4, scoped, tag = 'scoped memory for tpu_custom_call.1']
    #allocation15 [shape = 'u8[512]{0}', space=vmem, size = 0x400, scoped, tag = 'input window, operand 8, single buffered']
    %14 = vsyncpa [#allocation3], 0
    %15 = vsyncpa [#allocation5], 0
    %16 = vsyncpa [#allocation8], 0
    %17 = vsyncpa [#allocation11], 0
    %18 = vsyncpa [#allocation14], 0
    // Predicated region
    $region2: #{tpu_custom_call.1} parent=1 // pred_check
      _
    $region3: #{tpu_custom_call.1} parent=1 // pred_check_branch
      %20 = sbr.rel (0) target = $region5
    $region4: #{tpu_custom_call.1} parent=1 // pred_region
      %s22 = ssub.s32 3584, 3584
      %23 = vsyncadd [#allocation3], %s22
      %s24 = sshll.u32 [#allocation2], 4
      %s25 = int_to_ptr.vmem [resolvable:$true] %s24
      %30 = dma.hbm_to_vmem [thread:$0]  %s0, 3584, %s25, [#allocation3], 896, 896, 56
    $region5: #{tpu_custom_call.1} parent=1 // pred_fallthru
      _
    // Predicated region
    $region6: #{tpu_custom_call.1} parent=1 // pred_check
      _
    $region7: #{tpu_custom_call.1} parent=1 // pred_check_branch
      %32 = sbr.rel (0) target = $region9
    $region8: #{tpu_custom_call.1} parent=1 // pred_region
      %s34 = ssub.s32 50176, 50176
      %35 = vsyncadd [#allocation5], %s34
      %s36 = sshll.u32 [#allocation4], 4
      %s37 = int_to_ptr.vmem [resolvable:$true] %s36
      %42 = dma.hbm_to_vmem [thread:$0]  %s1, 50176, %s37, [#allocation5], 512, 512, 32
    $region9: #{tpu_custom_call.1} parent=1 // pred_fallthru
      _
    // Predicated region
    $region10: #{tpu_custom_call.1} parent=1 // pred_check
      _
    $region11: #{tpu_custom_call.1} parent=1 // pred_check_branch
      %44 = sbr.rel (0) target = $region13
    $region12: #{tpu_custom_call.1} parent=1 // pred_region
      %s46 = ssub.s32 64, 64
      %47 = vsyncadd [#allocation5], %s46
      %s49 = sshll.u32 [#allocation6], 4
      %s50 = int_to_ptr.vmem [resolvable:$true] %s49
      %52 = dma.hbm_to_vmem [thread:$0]  %s2, 64, %s50, [#allocation5]
    $region13: #{tpu_custom_call.1} parent=1 // pred_fallthru
      _
    // Predicated region
    $region14: #{tpu_custom_call.1} parent=1 // pred_check
      _
    $region15: #{tpu_custom_call.1} parent=1 // pred_check_branch
      %54 = sbr.rel (0) target = $region17
    $region16: #{tpu_custom_call.1} parent=1 // pred_region
      %s56 = ssub.s32 16384, 16384
      %57 = vsyncadd [#allocation8], %s56
      %s58 = sshll.u32 [#allocation7], 4
      %s59 = int_to_ptr.vmem [resolvable:$true] %s58
      %64 = dma.hbm_to_vmem [thread:$0]  %s3, 16384, %s59, [#allocation8], 256, 256, 16
    $region17: #{tpu_custom_call.1} parent=1 // pred_fallthru
      _
    // Predicated region
    $region18: #{tpu_custom_call.1} parent=1 // pred_check
      _
    $region19: #{tpu_custom_call.1} parent=1 // pred_check_branch
      %66 = sbr.rel (0) target = $region21
    $region20: #{tpu_custom_call.1} parent=1 // pred_region
      %s68 = ssub.s32 32, 32
      %69 = vsyncadd [#allocation8], %s68
      %s71 = sshll.u32 [#allocation9], 4
      %s72 = int_to_ptr.vmem [resolvable:$true] %s71
      %74 = dma.hbm_to_vmem [thread:$0]  %s4, 32, %s72, [#allocation8]
    $region21: #{tpu_custom_call.1} parent=1 // pred_fallthru
      _
    // Predicated region
    $region22: #{tpu_custom_call.1} parent=1 // pred_check
      _
    $region23: #{tpu_custom_call.1} parent=1 // pred_check_branch
      %76 = sbr.rel (0) target = $region25
    $region24: #{tpu_custom_call.1} parent=1 // pred_region
      %s78 = ssub.s32 4096, 4096
      %79 = vsyncadd [#allocation11], %s78
      %s80 = sshll.u32 [#allocation10], 4
      %s81 = int_to_ptr.vmem [resolvable:$true] %s80
      %86 = dma.hbm_to_vmem [thread:$0]  %s5, 4096, %s81, [#allocation11], 128, 128, 8
    $region25: #{tpu_custom_call.1} parent=1 // pred_fallthru
      _
    // Predicated region
    $region26: #{tpu_custom_call.1} parent=1 // pred_check
      _
    $region27: #{tpu_custom_call.1} parent=1 // pred_check_branch
      %88 = sbr.rel (0) target = $region29
    $region28: #{tpu_custom_call.1} parent=1 // pred_region
      %s90 = ssub.s32 16, 16
      %91 = vsyncadd [#allocation11], %s90
      %s93 = sshll.u32 [#allocation12], 4
      %s94 = int_to_ptr.vmem [resolvable:$true] %s93
      %96 = dma.hbm_to_vmem [thread:$0]  %s6, 16, %s94, [#allocation11]
    $region29: #{tpu_custom_call.1} parent=1 // pred_fallthru
      _
    // Predicated region
    $region30: #{tpu_custom_call.1} parent=1 // pred_check
      _
    $region31: #{tpu_custom_call.1} parent=1 // pred_check_branch
      %98 = sbr.rel (0) target = $region33
    $region32: #{tpu_custom_call.1} parent=1 // pred_region
      %s100 = ssub.s32 2048, 2048
      %101 = vsyncadd [#allocation14], %s100
      %s102 = sshll.u32 [#allocation13], 4
      %s103 = int_to_ptr.vmem [resolvable:$true] %s102
      %108 = dma.hbm_to_vmem [thread:$0]  %s7, 2048, %s103, [#allocation14], 128, 128, 8
    $region33: #{tpu_custom_call.1} parent=1 // pred_fallthru
      _
    // Predicated region
    $region34: #{tpu_custom_call.1} parent=1 // pred_check
      _
    $region35: #{tpu_custom_call.1} parent=1 // pred_check_branch
      %110 = sbr.rel (0) target = $region37
    $region36: #{tpu_custom_call.1} parent=1 // pred_region
      %s112 = ssub.s32 16, 16
      %113 = vsyncadd [#allocation14], %s112
      %s115 = sshll.u32 [#allocation15], 4
      %s116 = int_to_ptr.vmem [resolvable:$true] %s115
      %118 = dma.hbm_to_vmem [thread:$0]  %s8, 16, %s116, [#allocation14]
    $region37: #{tpu_custom_call.1} parent=1 // pred_fallthru
      _
    // Predicated region
    $region38: #{tpu_custom_call.1} parent=1 // pred_check
      _
    $region39: #{tpu_custom_call.1} parent=1 // pred_check_branch
      %120 = sbr.rel (0) target = $region41
    $region40: #{tpu_custom_call.1} parent=1 // pred_region
      %121 = dma.done [#allocation3], 3584
    $region41: #{tpu_custom_call.1} parent=1 // pred_fallthru
      _
    // Predicated region
    $region42: #{tpu_custom_call.1} parent=1 // pred_check
      _
    $region43: #{tpu_custom_call.1} parent=1 // pred_check_branch
      %123 = sbr.rel (0) target = $region45
    $region44: #{tpu_custom_call.1} parent=1 // pred_region
      %124 = dma.done [#allocation5], 50176
    $region45: #{tpu_custom_call.1} parent=1 // pred_fallthru
      _
    // Predicated region
    $region46: #{tpu_custom_call.1} parent=1 // pred_check
      _
    $region47: #{tpu_custom_call.1} parent=1 // pred_check_branch
      %126 = sbr.rel (0) target = $region49
    $region48: #{tpu_custom_call.1} parent=1 // pred_region
      %127 = dma.done [#allocation5], 64
    $region49: #{tpu_custom_call.1} parent=1 // pred_fallthru
      _
    // Predicated region
    $region50: #{tpu_custom_call.1} parent=1 // pred_check
      _
    $region51: #{tpu_custom_call.1} parent=1 // pred_check_branch
      %129 = sbr.rel (0) target = $region53
    $region52: #{tpu_custom_call.1} parent=1 // pred_region
      %130 = dma.done [#allocation8], 16384
    $region53: #{tpu_custom_call.1} parent=1 // pred_fallthru
      _
    // Predicated region
    $region54: #{tpu_custom_call.1} parent=1 // pred_check
      _
    $region55: #{tpu_custom_call.1} parent=1 // pred_check_branch
      %132 = sbr.rel (0) target = $region57
    $region56: #{tpu_custom_call.1} parent=1 // pred_region
      %133 = dma.done [#allocation8], 32
    $region57: #{tpu_custom_call.1} parent=1 // pred_fallthru
      _
    // Predicated region
    $region58: #{tpu_custom_call.1} parent=1 // pred_check
      _
    $region59: #{tpu_custom_call.1} parent=1 // pred_check_branch
      %135 = sbr.rel (0) target = $region61
    $region60: #{tpu_custom_call.1} parent=1 // pred_region
      %136 = dma.done [#allocation11], 4096
    $region61: #{tpu_custom_call.1} parent=1 // pred_fallthru
      _
    // Predicated region
    $region62: #{tpu_custom_call.1} parent=1 // pred_check
      _
    $region63: #{tpu_custom_call.1} parent=1 // pred_check_branch
      %138 = sbr.rel (0) target = $region65
    $region64: #{tpu_custom_call.1} parent=1 // pred_region
      %139 = dma.done [#allocation11], 16
    $region65: #{tpu_custom_call.1} parent=1 // pred_fallthru
      _
    // Predicated region
    $region66: #{tpu_custom_call.1} parent=1 // pred_check
      _
    $region67: #{tpu_custom_call.1} parent=1 // pred_check_branch
      %141 = sbr.rel (0) target = $region69
    $region68: #{tpu_custom_call.1} parent=1 // pred_region
      %142 = dma.done [#allocation14], 2048
    $region69: #{tpu_custom_call.1} parent=1 // pred_fallthru
      _
    // Predicated region
    $region70: #{tpu_custom_call.1} parent=1 // pred_check
      _
    $region71: #{tpu_custom_call.1} parent=1 // pred_check_branch
      %144 = sbr.rel (0) target = $region73
    $region72: #{tpu_custom_call.1} parent=1 // pred_region
      %145 = dma.done [#allocation14], 16
    $region73: #{tpu_custom_call.1} parent=1 // pred_fallthru
      _
    %v146 = vld [vmem:[#allocation2] sm:$0xff]
    %v147 = vld [vmem:[#allocation2 + $0x8] sm:$0xff]
    %v148 = vld [vmem:[#allocation2 + $0x10] sm:$0xff]
    %v149 = vld [vmem:[#allocation2 + $0x18] sm:$0xff]
    %v150 = vld [vmem:[#allocation2 + $0x20] sm:$0xff]
    %v151 = vld [vmem:[#allocation2 + $0x28] sm:$0xff]
    %v152 = vld [vmem:[#allocation2 + $0x30] sm:$0xff]
    %v153 = vld [vmem:[#allocation2 + $0x38] sm:$0xff]
    %v154 = vld [vmem:[#allocation2 + $0x40] sm:$0xff]
    %v155 = vld [vmem:[#allocation2 + $0x48] sm:$0xff]
    %v156 = vld [vmem:[#allocation2 + $0x50] sm:$0xff]
    %v157 = vld [vmem:[#allocation2 + $0x58] sm:$0xff]
    %v158 = vld [vmem:[#allocation2 + $0x60] sm:$0xff]
    %v159 = vld [vmem:[#allocation2 + $0x68] sm:$0xff]
    %v160 = vld [vmem:[#allocation2 + $0x70] sm:$0xff]
    %v161 = vld [vmem:[#allocation2 + $0x78] sm:$0xff]
    %v162 = vld [vmem:[#allocation2 + $0x80] sm:$0xff]
    %v163 = vld [vmem:[#allocation2 + $0x88] sm:$0xff]
    %v164 = vld [vmem:[#allocation2 + $0x90] sm:$0xff]
    %v165 = vld [vmem:[#allocation2 + $0x98] sm:$0xff]
    %v166 = vld [vmem:[#allocation2 + $0xa0] sm:$0xff]
    %v167 = vld [vmem:[#allocation2 + $0xa8] sm:$0xff]
    %v168 = vld [vmem:[#allocation2 + $0xb0] sm:$0xff]
    %v169 = vld [vmem:[#allocation2 + $0xb8] sm:$0xff]
    %v170 = vld [vmem:[#allocation2 + $0xc0] sm:$0xff]
    %v171 = vld [vmem:[#allocation2 + $0xc8] sm:$0xff]
    %v172 = vld [vmem:[#allocation2 + $0xd0] sm:$0xff]
    %v173 = vld [vmem:[#allocation2 + $0xd8] sm:$0xff]
    %v174 = vld [vmem:[#allocation4] sm:$0xff]
    %v175 = vld [vmem:[#allocation4 + $0x8] sm:$0xff]
    %v176 = vld [vmem:[#allocation4 + $0x10] sm:$0xff]
    %v177 = vld [vmem:[#allocation4 + $0x18] sm:$0xff]
    %v178 = vld [vmem:[#allocation4 + $0x20] sm:$0xff]
    %v179 = vld [vmem:[#allocation4 + $0x28] sm:$0xff]
    %v180 = vld [vmem:[#allocation4 + $0x30] sm:$0xff]
    %v181 = vld [vmem:[#allocation4 + $0x38] sm:$0xff]
    %v182 = vld [vmem:[#allocation4 + $0x40] sm:$0xff]
    %v183 = vld [vmem:[#allocation4 + $0x48] sm:$0xff]
    %v184 = vld [vmem:[#allocation4 + $0x50] sm:$0xff]
    %v185 = vld [vmem:[#allocation4 + $0x58] sm:$0xff]
    %v186 = vld [vmem:[#allocation4 + $0x60] sm:$0xff]
    %v187 = vld [vmem:[#allocation4 + $0x68] sm:$0xff]
    %v188 = vld [vmem:[#allocation4 + $0x70] sm:$0xff]
    %v189 = vld [vmem:[#allocation4 + $0x78] sm:$0xff]
    %v190 = vld [vmem:[#allocation4 + $0x80] sm:$0xff]
    %v191 = vld [vmem:[#allocation4 + $0x88] sm:$0xff]
    %v192 = vld [vmem:[#allocation4 + $0x90] sm:$0xff]
    %v193 = vld [vmem:[#allocation4 + $0x98] sm:$0xff]
    %v194 = vld [vmem:[#allocation4 + $0xa0] sm:$0xff]
    %v195 = vld [vmem:[#allocation4 + $0xa8] sm:$0xff]
    %v196 = vld [vmem:[#allocation4 + $0xb0] sm:$0xff]
    %v197 = vld [vmem:[#allocation4 + $0xb8] sm:$0xff]
    %v198 = vld [vmem:[#allocation4 + $0xc0] sm:$0xff]
    %v199 = vld [vmem:[#allocation4 + $0xc8] sm:$0xff]
    %v200 = vld [vmem:[#allocation4 + $0xd0] sm:$0xff]
    %v201 = vld [vmem:[#allocation4 + $0xd8] sm:$0xff]
    %v202 = vld [vmem:[#allocation4 + $0xe0] sm:$0xff]
    %v203 = vld [vmem:[#allocation4 + $0xe8] sm:$0xff]
    %v204 = vld [vmem:[#allocation4 + $0xf0] sm:$0xff]
    %v205 = vld [vmem:[#allocation4 + $0xf8] sm:$0xff]
    %v206 = vld [vmem:[#allocation4 + $0x100] sm:$0xff]
    %v207 = vld [vmem:[#allocation4 + $0x108] sm:$0xff]
    %v208 = vld [vmem:[#allocation4 + $0x110] sm:$0xff]
    %v209 = vld [vmem:[#allocation4 + $0x118] sm:$0xff]
    %v210 = vld [vmem:[#allocation4 + $0x120] sm:$0xff]
    %v211 = vld [vmem:[#allocation4 + $0x128] sm:$0xff]
    %v212 = vld [vmem:[#allocation4 + $0x130] sm:$0xff]
    %v213 = vld [vmem:[#allocation4 + $0x138] sm:$0xff]
    %v214 = vld [vmem:[#allocation4 + $0x140] sm:$0xff]
    %v215 = vld [vmem:[#allocation4 + $0x148] sm:$0xff]
    %v216 = vld [vmem:[#allocation4 + $0x150] sm:$0xff]
    %v217 = vld [vmem:[#allocation4 + $0x158] sm:$0xff]
    %v218 = vld [vmem:[#allocation4 + $0x160] sm:$0xff]
    %v219 = vld [vmem:[#allocation4 + $0x168] sm:$0xff]
    %v220 = vld [vmem:[#allocation4 + $0x170] sm:$0xff]
    %v221 = vld [vmem:[#allocation4 + $0x178] sm:$0xff]
    %v222 = vld [vmem:[#allocation4 + $0x180] sm:$0xff]
    %v223 = vld [vmem:[#allocation4 + $0x188] sm:$0xff]
    %v224 = vld [vmem:[#allocation4 + $0x190] sm:$0xff]
    %v225 = vld [vmem:[#allocation4 + $0x198] sm:$0xff]
    %v226 = vld [vmem:[#allocation4 + $0x1a0] sm:$0xff]
    %v227 = vld [vmem:[#allocation4 + $0x1a8] sm:$0xff]
    %v228 = vld [vmem:[#allocation4 + $0x1b0] sm:$0xff]
    %v229 = vld [vmem:[#allocation4 + $0x1b8] sm:$0xff]
    %v230 = vld [vmem:[#allocation4 + $0x1c0] sm:$0xff]
    %v231 = vld [vmem:[#allocation4 + $0x1c8] sm:$0xff]
    %v232 = vld [vmem:[#allocation4 + $0x1d0] sm:$0xff]
    %v233 = vld [vmem:[#allocation4 + $0x1d8] sm:$0xff]
    %v234 = vld [vmem:[#allocation4 + $0x1e0] sm:$0xff]
    %v235 = vld [vmem:[#allocation4 + $0x1e8] sm:$0xff]
    %v236 = vld [vmem:[#allocation4 + $0x1f0] sm:$0xff]
    %v237 = vld [vmem:[#allocation4 + $0x1f8] sm:$0xff]
    %v238 = vld [vmem:[#allocation4 + $0x200] sm:$0xff]
    %v239 = vld [vmem:[#allocation4 + $0x208] sm:$0xff]
    %v240 = vld [vmem:[#allocation4 + $0x210] sm:$0xff]
    %v241 = vld [vmem:[#allocation4 + $0x218] sm:$0xff]
    %v242 = vld [vmem:[#allocation4 + $0x220] sm:$0xff]
    %v243 = vld [vmem:[#allocation4 + $0x228] sm:$0xff]
    %v244 = vld [vmem:[#allocation4 + $0x230] sm:$0xff]
    %v245 = vld [vmem:[#allocation4 + $0x238] sm:$0xff]
    %v246 = vld [vmem:[#allocation4 + $0x240] sm:$0xff]
    %v247 = vld [vmem:[#allocation4 + $0x248] sm:$0xff]
    %v248 = vld [vmem:[#allocation4 + $0x250] sm:$0xff]
    %v249 = vld [vmem:[#allocation4 + $0x258] sm:$0xff]
    %v250 = vld [vmem:[#allocation4 + $0x260] sm:$0xff]
    %v251 = vld [vmem:[#allocation4 + $0x268] sm:$0xff]
    %v252 = vld [vmem:[#allocation4 + $0x270] sm:$0xff]
    %v253 = vld [vmem:[#allocation4 + $0x278] sm:$0xff]
    %v254 = vld [vmem:[#allocation4 + $0x280] sm:$0xff]
    %v255 = vld [vmem:[#allocation4 + $0x288] sm:$0xff]
    %v256 = vld [vmem:[#allocation4 + $0x290] sm:$0xff]
    %v257 = vld [vmem:[#allocation4 + $0x298] sm:$0xff]
    %v258 = vld [vmem:[#allocation4 + $0x2a0] sm:$0xff]
    %v259 = vld [vmem:[#allocation4 + $0x2a8] sm:$0xff]
    %v260 = vld [vmem:[#allocation4 + $0x2b0] sm:$0xff]
    %v261 = vld [vmem:[#allocation4 + $0x2b8] sm:$0xff]
    %v262 = vld [vmem:[#allocation4 + $0x2c0] sm:$0xff]
    %v263 = vld [vmem:[#allocation4 + $0x2c8] sm:$0xff]
    %v264 = vld [vmem:[#allocation4 + $0x2d0] sm:$0xff]
    %v265 = vld [vmem:[#allocation4 + $0x2d8] sm:$0xff]
    %v266 = vld [vmem:[#allocation4 + $0x2e0] sm:$0xff]
    %v267 = vld [vmem:[#allocation4 + $0x2e8] sm:$0xff]
    %v268 = vld [vmem:[#allocation4 + $0x2f0] sm:$0xff]
    %v269 = vld [vmem:[#allocation4 + $0x2f8] sm:$0xff]
    %v270 = vld [vmem:[#allocation4 + $0x300] sm:$0xff]
    %v271 = vld [vmem:[#allocation4 + $0x308] sm:$0xff]
    %v272 = vld [vmem:[#allocation4 + $0x310] sm:$0xff]
    %v273 = vld [vmem:[#allocation4 + $0x318] sm:$0xff]
    %v274 = vld [vmem:[#allocation4 + $0x320] sm:$0xff]
    %v275 = vld [vmem:[#allocation4 + $0x328] sm:$0xff]
    %v276 = vld [vmem:[#allocation4 + $0x330] sm:$0xff]
    %v277 = vld [vmem:[#allocation4 + $0x338] sm:$0xff]
    %v278 = vld [vmem:[#allocation4 + $0x340] sm:$0xff]
    %v279 = vld [vmem:[#allocation4 + $0x348] sm:$0xff]
    %v280 = vld [vmem:[#allocation4 + $0x350] sm:$0xff]
    %v281 = vld [vmem:[#allocation4 + $0x358] sm:$0xff]
    %v282 = vld [vmem:[#allocation4 + $0x360] sm:$0xff]
    %v283 = vld [vmem:[#allocation4 + $0x368] sm:$0xff]
    %v284 = vld [vmem:[#allocation4 + $0x370] sm:$0xff]
    %v285 = vld [vmem:[#allocation4 + $0x378] sm:$0xff]
    %v286 = vld [vmem:[#allocation4 + $0x380] sm:$0xff]
    %v287 = vld [vmem:[#allocation4 + $0x388] sm:$0xff]
    %v288 = vld [vmem:[#allocation4 + $0x390] sm:$0xff]
    %v289 = vld [vmem:[#allocation4 + $0x398] sm:$0xff]
    %v290 = vld [vmem:[#allocation4 + $0x3a0] sm:$0xff]
    %v291 = vld [vmem:[#allocation4 + $0x3a8] sm:$0xff]
    %v292 = vld [vmem:[#allocation4 + $0x3b0] sm:$0xff]
    %v293 = vld [vmem:[#allocation4 + $0x3b8] sm:$0xff]
    %v294 = vld [vmem:[#allocation4 + $0x3c0] sm:$0xff]
    %v295 = vld [vmem:[#allocation4 + $0x3c8] sm:$0xff]
    %v296 = vld [vmem:[#allocation4 + $0x3d0] sm:$0xff]
    %v297 = vld [vmem:[#allocation4 + $0x3d8] sm:$0xff]
    %v298 = vld [vmem:[#allocation4 + $0x3e0] sm:$0xff]
    %v299 = vld [vmem:[#allocation4 + $0x3e8] sm:$0xff]
    %v300 = vld [vmem:[#allocation4 + $0x3f0] sm:$0xff]
    %v301 = vld [vmem:[#allocation4 + $0x3f8] sm:$0xff]
    %v302 = vld [vmem:[#allocation4 + $0x400] sm:$0xff]
    %v303 = vld [vmem:[#allocation4 + $0x408] sm:$0xff]
    %v304 = vld [vmem:[#allocation4 + $0x410] sm:$0xff]
    %v305 = vld [vmem:[#allocation4 + $0x418] sm:$0xff]
    %v306 = vld [vmem:[#allocation4 + $0x420] sm:$0xff]
    %v307 = vld [vmem:[#allocation4 + $0x428] sm:$0xff]
    %v308 = vld [vmem:[#allocation4 + $0x430] sm:$0xff]
    %v309 = vld [vmem:[#allocation4 + $0x438] sm:$0xff]
    %v310 = vld [vmem:[#allocation4 + $0x440] sm:$0xff]
    %v311 = vld [vmem:[#allocation4 + $0x448] sm:$0xff]
    %v312 = vld [vmem:[#allocation4 + $0x450] sm:$0xff]
    %v313 = vld [vmem:[#allocation4 + $0x458] sm:$0xff]
    %v314 = vld [vmem:[#allocation4 + $0x460] sm:$0xff]
    %v315 = vld [vmem:[#allocation4 + $0x468] sm:$0xff]
    %v316 = vld [vmem:[#allocation4 + $0x470] sm:$0xff]
    %v317 = vld [vmem:[#allocation4 + $0x478] sm:$0xff]
    %v318 = vld [vmem:[#allocation4 + $0x480] sm:$0xff]
    %v319 = vld [vmem:[#allocation4 + $0x488] sm:$0xff]
    %v320 = vld [vmem:[#allocation4 + $0x490] sm:$0xff]
    %v321 = vld [vmem:[#allocation4 + $0x498] sm:$0xff]
    %v322 = vld [vmem:[#allocation4 + $0x4a0] sm:$0xff]
    %v323 = vld [vmem:[#allocation4 + $0x4a8] sm:$0xff]
    %v324 = vld [vmem:[#allocation4 + $0x4b0] sm:$0xff]
    %v325 = vld [vmem:[#allocation4 + $0x4b8] sm:$0xff]
    %v326 = vld [vmem:[#allocation4 + $0x4c0] sm:$0xff]
    %v327 = vld [vmem:[#allocation4 + $0x4c8] sm:$0xff]
    %v328 = vld [vmem:[#allocation4 + $0x4d0] sm:$0xff]
    %v329 = vld [vmem:[#allocation4 + $0x4d8] sm:$0xff]
    %v330 = vld [vmem:[#allocation4 + $0x4e0] sm:$0xff]
    %v331 = vld [vmem:[#allocation4 + $0x4e8] sm:$0xff]
    %v332 = vld [vmem:[#allocation4 + $0x4f0] sm:$0xff]
    %v333 = vld [vmem:[#allocation4 + $0x4f8] sm:$0xff]
    %v334 = vld [vmem:[#allocation4 + $0x500] sm:$0xff]
    %v335 = vld [vmem:[#allocation4 + $0x508] sm:$0xff]
    %v336 = vld [vmem:[#allocation4 + $0x510] sm:$0xff]
    %v337 = vld [vmem:[#allocation4 + $0x518] sm:$0xff]
    %v338 = vld [vmem:[#allocation4 + $0x520] sm:$0xff]
    %v339 = vld [vmem:[#allocation4 + $0x528] sm:$0xff]
    %v340 = vld [vmem:[#allocation4 + $0x530] sm:$0xff]
    %v341 = vld [vmem:[#allocation4 + $0x538] sm:$0xff]
    %v342 = vld [vmem:[#allocation4 + $0x540] sm:$0xff]
    %v343 = vld [vmem:[#allocation4 + $0x548] sm:$0xff]
    %v344 = vld [vmem:[#allocation4 + $0x550] sm:$0xff]
    %v345 = vld [vmem:[#allocation4 + $0x558] sm:$0xff]
    %v346 = vld [vmem:[#allocation4 + $0x560] sm:$0xff]
    %v347 = vld [vmem:[#allocation4 + $0x568] sm:$0xff]
    %v348 = vld [vmem:[#allocation4 + $0x570] sm:$0xff]
    %v349 = vld [vmem:[#allocation4 + $0x578] sm:$0xff]
    %v350 = vld [vmem:[#allocation4 + $0x580] sm:$0xff]
    %v351 = vld [vmem:[#allocation4 + $0x588] sm:$0xff]
    %v352 = vld [vmem:[#allocation4 + $0x590] sm:$0xff]
    %v353 = vld [vmem:[#allocation4 + $0x598] sm:$0xff]
    %v354 = vld [vmem:[#allocation4 + $0x5a0] sm:$0xff]
    %v355 = vld [vmem:[#allocation4 + $0x5a8] sm:$0xff]
    %v356 = vld [vmem:[#allocation4 + $0x5b0] sm:$0xff]
    %v357 = vld [vmem:[#allocation4 + $0x5b8] sm:$0xff]
    %v358 = vld [vmem:[#allocation4 + $0x5c0] sm:$0xff]
    %v359 = vld [vmem:[#allocation4 + $0x5c8] sm:$0xff]
    %v360 = vld [vmem:[#allocation4 + $0x5d0] sm:$0xff]
    %v361 = vld [vmem:[#allocation4 + $0x5d8] sm:$0xff]
    %v362 = vld [vmem:[#allocation4 + $0x5e0] sm:$0xff]
    %v363 = vld [vmem:[#allocation4 + $0x5e8] sm:$0xff]
    %v364 = vld [vmem:[#allocation4 + $0x5f0] sm:$0xff]
    %v365 = vld [vmem:[#allocation4 + $0x5f8] sm:$0xff]
    %v366 = vld [vmem:[#allocation4 + $0x600] sm:$0xff]
    %v367 = vld [vmem:[#allocation4 + $0x608] sm:$0xff]
    %v368 = vld [vmem:[#allocation4 + $0x610] sm:$0xff]
    %v369 = vld [vmem:[#allocation4 + $0x618] sm:$0xff]
    %v370 = vld [vmem:[#allocation4 + $0x620] sm:$0xff]
    %v371 = vld [vmem:[#allocation4 + $0x628] sm:$0xff]
    %v372 = vld [vmem:[#allocation4 + $0x630] sm:$0xff]
    %v373 = vld [vmem:[#allocation4 + $0x638] sm:$0xff]
    %v374 = vld [vmem:[#allocation4 + $0x640] sm:$0xff]
    %v375 = vld [vmem:[#allocation4 + $0x648] sm:$0xff]
    %v376 = vld [vmem:[#allocation4 + $0x650] sm:$0xff]
    %v377 = vld [vmem:[#allocation4 + $0x658] sm:$0xff]
    %v378 = vld [vmem:[#allocation4 + $0x660] sm:$0xff]
    %v379 = vld [vmem:[#allocation4 + $0x668] sm:$0xff]
    %v380 = vld [vmem:[#allocation4 + $0x670] sm:$0xff]
    %v381 = vld [vmem:[#allocation4 + $0x678] sm:$0xff]
    %v382 = vld [vmem:[#allocation4 + $0x680] sm:$0xff]
    %v383 = vld [vmem:[#allocation4 + $0x688] sm:$0xff]
    %v384 = vld [vmem:[#allocation4 + $0x690] sm:$0xff]
    %v385 = vld [vmem:[#allocation4 + $0x698] sm:$0xff]
    %v386 = vld [vmem:[#allocation4 + $0x6a0] sm:$0xff]
    %v387 = vld [vmem:[#allocation4 + $0x6a8] sm:$0xff]
    %v388 = vld [vmem:[#allocation4 + $0x6b0] sm:$0xff]
    %v389 = vld [vmem:[#allocation4 + $0x6b8] sm:$0xff]
    %v390 = vld [vmem:[#allocation4 + $0x6c0] sm:$0xff]
    %v391 = vld [vmem:[#allocation4 + $0x6c8] sm:$0xff]
    %v392 = vld [vmem:[#allocation4 + $0x6d0] sm:$0xff]
    %v393 = vld [vmem:[#allocation4 + $0x6d8] sm:$0xff]
    %v394 = vld [vmem:[#allocation4 + $0x6e0] sm:$0xff]
    %v395 = vld [vmem:[#allocation4 + $0x6e8] sm:$0xff]
    %v396 = vld [vmem:[#allocation4 + $0x6f0] sm:$0xff]
    %v397 = vld [vmem:[#allocation4 + $0x6f8] sm:$0xff]
    %v398 = vld [vmem:[#allocation4 + $0x700] sm:$0xff]
    %v399 = vld [vmem:[#allocation4 + $0x708] sm:$0xff]
    %v400 = vld [vmem:[#allocation4 + $0x710] sm:$0xff]
    %v401 = vld [vmem:[#allocation4 + $0x718] sm:$0xff]
    %v402 = vld [vmem:[#allocation4 + $0x720] sm:$0xff]
    %v403 = vld [vmem:[#allocation4 + $0x728] sm:$0xff]
    %v404 = vld [vmem:[#allocation4 + $0x730] sm:$0xff]
    %v405 = vld [vmem:[#allocation4 + $0x738] sm:$0xff]
    %v406 = vld [vmem:[#allocation4 + $0x740] sm:$0xff]
    %v407 = vld [vmem:[#allocation4 + $0x748] sm:$0xff]
    %v408 = vld [vmem:[#allocation4 + $0x750] sm:$0xff]
    %v409 = vld [vmem:[#allocation4 + $0x758] sm:$0xff]
    %v410 = vld [vmem:[#allocation4 + $0x760] sm:$0xff]
    %v411 = vld [vmem:[#allocation4 + $0x768] sm:$0xff]
    %v412 = vld [vmem:[#allocation4 + $0x770] sm:$0xff]
    %v413 = vld [vmem:[#allocation4 + $0x778] sm:$0xff]
    %v414 = vld [vmem:[#allocation4 + $0x780] sm:$0xff]
    %v415 = vld [vmem:[#allocation4 + $0x788] sm:$0xff]
    %v416 = vld [vmem:[#allocation4 + $0x790] sm:$0xff]
    %v417 = vld [vmem:[#allocation4 + $0x798] sm:$0xff]
    %v418 = vld [vmem:[#allocation4 + $0x7a0] sm:$0xff]
    %v419 = vld [vmem:[#allocation4 + $0x7a8] sm:$0xff]
    %v420 = vld [vmem:[#allocation4 + $0x7b0] sm:$0xff]
    %v421 = vld [vmem:[#allocation4 + $0x7b8] sm:$0xff]
    %v422 = vld [vmem:[#allocation4 + $0x7c0] sm:$0xff]
    %v423 = vld [vmem:[#allocation4 + $0x7c8] sm:$0xff]
    %v424 = vld [vmem:[#allocation4 + $0x7d0] sm:$0xff]
    %v425 = vld [vmem:[#allocation4 + $0x7d8] sm:$0xff]
    %v426 = vld [vmem:[#allocation4 + $0x7e0] sm:$0xff]
    %v427 = vld [vmem:[#allocation4 + $0x7e8] sm:$0xff]
    %v428 = vld [vmem:[#allocation4 + $0x7f0] sm:$0xff]
    %v429 = vld [vmem:[#allocation4 + $0x7f8] sm:$0xff]
    %v430 = vld [vmem:[#allocation4 + $0x800] sm:$0xff]
    %v431 = vld [vmem:[#allocation4 + $0x808] sm:$0xff]
    %v432 = vld [vmem:[#allocation4 + $0x810] sm:$0xff]
    %v433 = vld [vmem:[#allocation4 + $0x818] sm:$0xff]
    %v434 = vld [vmem:[#allocation4 + $0x820] sm:$0xff]
    %v435 = vld [vmem:[#allocation4 + $0x828] sm:$0xff]
    %v436 = vld [vmem:[#allocation4 + $0x830] sm:$0xff]
    %v437 = vld [vmem:[#allocation4 + $0x838] sm:$0xff]
    %v438 = vld [vmem:[#allocation4 + $0x840] sm:$0xff]
    %v439 = vld [vmem:[#allocation4 + $0x848] sm:$0xff]
    %v440 = vld [vmem:[#allocation4 + $0x850] sm:$0xff]
    %v441 = vld [vmem:[#allocation4 + $0x858] sm:$0xff]
    %v442 = vld [vmem:[#allocation4 + $0x860] sm:$0xff]
    %v443 = vld [vmem:[#allocation4 + $0x868] sm:$0xff]
    %v444 = vld [vmem:[#allocation4 + $0x870] sm:$0xff]
    %v445 = vld [vmem:[#allocation4 + $0x878] sm:$0xff]
    %v446 = vld [vmem:[#allocation4 + $0x880] sm:$0xff]
    %v447 = vld [vmem:[#allocation4 + $0x888] sm:$0xff]
    %v448 = vld [vmem:[#allocation4 + $0x890] sm:$0xff]
    %v449 = vld [vmem:[#allocation4 + $0x898] sm:$0xff]
    %v450 = vld [vmem:[#allocation4 + $0x8a0] sm:$0xff]
    %v451 = vld [vmem:[#allocation4 + $0x8a8] sm:$0xff]
    %v452 = vld [vmem:[#allocation4 + $0x8b0] sm:$0xff]
    %v453 = vld [vmem:[#allocation4 + $0x8b8] sm:$0xff]
    %v454 = vld [vmem:[#allocation4 + $0x8c0] sm:$0xff]
    %v455 = vld [vmem:[#allocation4 + $0x8c8] sm:$0xff]
    %v456 = vld [vmem:[#allocation4 + $0x8d0] sm:$0xff]
    %v457 = vld [vmem:[#allocation4 + $0x8d8] sm:$0xff]
    %v458 = vld [vmem:[#allocation4 + $0x8e0] sm:$0xff]
    %v459 = vld [vmem:[#allocation4 + $0x8e8] sm:$0xff]
    %v460 = vld [vmem:[#allocation4 + $0x8f0] sm:$0xff]
    %v461 = vld [vmem:[#allocation4 + $0x8f8] sm:$0xff]
    %v462 = vld [vmem:[#allocation4 + $0x900] sm:$0xff]
    %v463 = vld [vmem:[#allocation4 + $0x908] sm:$0xff]
    %v464 = vld [vmem:[#allocation4 + $0x910] sm:$0xff]
    %v465 = vld [vmem:[#allocation4 + $0x918] sm:$0xff]
    %v466 = vld [vmem:[#allocation4 + $0x920] sm:$0xff]
    %v467 = vld [vmem:[#allocation4 + $0x928] sm:$0xff]
    %v468 = vld [vmem:[#allocation4 + $0x930] sm:$0xff]
    %v469 = vld [vmem:[#allocation4 + $0x938] sm:$0xff]
    %v470 = vld [vmem:[#allocation4 + $0x940] sm:$0xff]
    %v471 = vld [vmem:[#allocation4 + $0x948] sm:$0xff]
    %v472 = vld [vmem:[#allocation4 + $0x950] sm:$0xff]
    %v473 = vld [vmem:[#allocation4 + $0x958] sm:$0xff]
    %v474 = vld [vmem:[#allocation4 + $0x960] sm:$0xff]
    %v475 = vld [vmem:[#allocation4 + $0x968] sm:$0xff]
    %v476 = vld [vmem:[#allocation4 + $0x970] sm:$0xff]
    %v477 = vld [vmem:[#allocation4 + $0x978] sm:$0xff]
    %v478 = vld [vmem:[#allocation4 + $0x980] sm:$0xff]
    %v479 = vld [vmem:[#allocation4 + $0x988] sm:$0xff]
    %v480 = vld [vmem:[#allocation4 + $0x990] sm:$0xff]
    %v481 = vld [vmem:[#allocation4 + $0x998] sm:$0xff]
    %v482 = vld [vmem:[#allocation4 + $0x9a0] sm:$0xff]
    %v483 = vld [vmem:[#allocation4 + $0x9a8] sm:$0xff]
    %v484 = vld [vmem:[#allocation4 + $0x9b0] sm:$0xff]
    %v485 = vld [vmem:[#allocation4 + $0x9b8] sm:$0xff]
    %v486 = vld [vmem:[#allocation4 + $0x9c0] sm:$0xff]
    %v487 = vld [vmem:[#allocation4 + $0x9c8] sm:$0xff]
    %v488 = vld [vmem:[#allocation4 + $0x9d0] sm:$0xff]
    %v489 = vld [vmem:[#allocation4 + $0x9d8] sm:$0xff]
    %v490 = vld [vmem:[#allocation4 + $0x9e0] sm:$0xff]
    %v491 = vld [vmem:[#allocation4 + $0x9e8] sm:$0xff]
    %v492 = vld [vmem:[#allocation4 + $0x9f0] sm:$0xff]
    %v493 = vld [vmem:[#allocation4 + $0x9f8] sm:$0xff]
    %v494 = vld [vmem:[#allocation4 + $0xa00] sm:$0xff]
    %v495 = vld [vmem:[#allocation4 + $0xa08] sm:$0xff]
    %v496 = vld [vmem:[#allocation4 + $0xa10] sm:$0xff]
    %v497 = vld [vmem:[#allocation4 + $0xa18] sm:$0xff]
    %v498 = vld [vmem:[#allocation4 + $0xa20] sm:$0xff]
    %v499 = vld [vmem:[#allocation4 + $0xa28] sm:$0xff]
    %v500 = vld [vmem:[#allocation4 + $0xa30] sm:$0xff]
    %v501 = vld [vmem:[#allocation4 + $0xa38] sm:$0xff]
    %v502 = vld [vmem:[#allocation4 + $0xa40] sm:$0xff]
    %v503 = vld [vmem:[#allocation4 + $0xa48] sm:$0xff]
    %v504 = vld [vmem:[#allocation4 + $0xa50] sm:$0xff]
    %v505 = vld [vmem:[#allocation4 + $0xa58] sm:$0xff]
    %v506 = vld [vmem:[#allocation4 + $0xa60] sm:$0xff]
    %v507 = vld [vmem:[#allocation4 + $0xa68] sm:$0xff]
    %v508 = vld [vmem:[#allocation4 + $0xa70] sm:$0xff]
    %v509 = vld [vmem:[#allocation4 + $0xa78] sm:$0xff]
    %v510 = vld [vmem:[#allocation4 + $0xa80] sm:$0xff]
    %v511 = vld [vmem:[#allocation4 + $0xa88] sm:$0xff]
    %v512 = vld [vmem:[#allocation4 + $0xa90] sm:$0xff]
    %v513 = vld [vmem:[#allocation4 + $0xa98] sm:$0xff]
    %v514 = vld [vmem:[#allocation4 + $0xaa0] sm:$0xff]
    %v515 = vld [vmem:[#allocation4 + $0xaa8] sm:$0xff]
    %v516 = vld [vmem:[#allocation4 + $0xab0] sm:$0xff]
    %v517 = vld [vmem:[#allocation4 + $0xab8] sm:$0xff]
    %v518 = vld [vmem:[#allocation4 + $0xac0] sm:$0xff]
    %v519 = vld [vmem:[#allocation4 + $0xac8] sm:$0xff]
    %v520 = vld [vmem:[#allocation4 + $0xad0] sm:$0xff]
    %v521 = vld [vmem:[#allocation4 + $0xad8] sm:$0xff]
    %v522 = vld [vmem:[#allocation4 + $0xae0] sm:$0xff]
    %v523 = vld [vmem:[#allocation4 + $0xae8] sm:$0xff]
    %v524 = vld [vmem:[#allocation4 + $0xaf0] sm:$0xff]
    %v525 = vld [vmem:[#allocation4 + $0xaf8] sm:$0xff]
    %v526 = vld [vmem:[#allocation4 + $0xb00] sm:$0xff]
    %v527 = vld [vmem:[#allocation4 + $0xb08] sm:$0xff]
    %v528 = vld [vmem:[#allocation4 + $0xb10] sm:$0xff]
    %v529 = vld [vmem:[#allocation4 + $0xb18] sm:$0xff]
    %v530 = vld [vmem:[#allocation4 + $0xb20] sm:$0xff]
    %v531 = vld [vmem:[#allocation4 + $0xb28] sm:$0xff]
    %v532 = vld [vmem:[#allocation4 + $0xb30] sm:$0xff]
    %v533 = vld [vmem:[#allocation4 + $0xb38] sm:$0xff]
    %v534 = vld [vmem:[#allocation4 + $0xb40] sm:$0xff]
    %v535 = vld [vmem:[#allocation4 + $0xb48] sm:$0xff]
    %v536 = vld [vmem:[#allocation4 + $0xb50] sm:$0xff]
    %v537 = vld [vmem:[#allocation4 + $0xb58] sm:$0xff]
    %v538 = vld [vmem:[#allocation4 + $0xb60] sm:$0xff]
    %v539 = vld [vmem:[#allocation4 + $0xb68] sm:$0xff]
    %v540 = vld [vmem:[#allocation4 + $0xb70] sm:$0xff]
    %v541 = vld [vmem:[#allocation4 + $0xb78] sm:$0xff]
    %v542 = vld [vmem:[#allocation4 + $0xb80] sm:$0xff]
    %v543 = vld [vmem:[#allocation4 + $0xb88] sm:$0xff]
    %v544 = vld [vmem:[#allocation4 + $0xb90] sm:$0xff]
    %v545 = vld [vmem:[#allocation4 + $0xb98] sm:$0xff]
    %v546 = vld [vmem:[#allocation4 + $0xba0] sm:$0xff]
    %v547 = vld [vmem:[#allocation4 + $0xba8] sm:$0xff]
    %v548 = vld [vmem:[#allocation4 + $0xbb0] sm:$0xff]
    %v549 = vld [vmem:[#allocation4 + $0xbb8] sm:$0xff]
    %v550 = vld [vmem:[#allocation4 + $0xbc0] sm:$0xff]
    %v551 = vld [vmem:[#allocation4 + $0xbc8] sm:$0xff]
    %v552 = vld [vmem:[#allocation4 + $0xbd0] sm:$0xff]
    %v553 = vld [vmem:[#allocation4 + $0xbd8] sm:$0xff]
    %v554 = vld [vmem:[#allocation4 + $0xbe0] sm:$0xff]
    %v555 = vld [vmem:[#allocation4 + $0xbe8] sm:$0xff]
    %v556 = vld [vmem:[#allocation4 + $0xbf0] sm:$0xff]
    %v557 = vld [vmem:[#allocation4 + $0xbf8] sm:$0xff]
    %v558 = vld [vmem:[#allocation4 + $0xc00] sm:$0xff]
    %v559 = vld [vmem:[#allocation4 + $0xc08] sm:$0xff]
    %v560 = vld [vmem:[#allocation4 + $0xc10] sm:$0xff]
    %v561 = vld [vmem:[#allocation4 + $0xc18] sm:$0xff]
    %v562 = vld [vmem:[#allocation4 + $0xc20] sm:$0xff]
    %v563 = vld [vmem:[#allocation4 + $0xc28] sm:$0xff]
    %v564 = vld [vmem:[#allocation4 + $0xc30] sm:$0xff]
    %v565 = vld [vmem:[#allocation4 + $0xc38] sm:$0xff]
    %v566 = vld [vmem:[#allocation6] sm:$0xf]
    %v568 = vlaneseq
    %v569 = vshrl.u32 %v568, 7
    %v570 = vsub.s32 0, %v569
    %v571 = vrot.slane %v566, %v570
    %v572 = vlaneseq
    %v573 = vshrl.u32 %v572, 7
    %v574 = vsub.s32 1, %v573
    %v575 = vrot.slane %v566, %v574
    %v576 = vlaneseq
    %v577 = vshrl.u32 %v576, 7
    %v578 = vsub.s32 2, %v577
    %v579 = vrot.slane %v566, %v578
    %v580 = vlaneseq
    %v581 = vshrl.u32 %v580, 7
    %v582 = vsub.s32 3, %v581
    %v583 = vrot.slane %v566, %v582
    %vm588 = vcmask 130048
    %v590 = vsel %vm588, %v152, 0
    %v593 = vsel %vm588, %v159, 0
    %v596 = vsel %vm588, %v166, 0
    %v599 = vsel %vm588, %v173, 0
    %601 = vmatprep.subr.mxu0 %v175
    %602 = vmatpush1.msra.mxu0 %v174
    %603 = vmatprep.subr.mxu0 %v179
    %604 = vmatpush1.msra.mxu0 %v178
    %605 = vmatprep.subr.mxu0 %v183
    %606 = vmatpush1.msra.mxu0 %v182
    %607 = vmatprep.subr.mxu0 %v187
    %608 = vmatpush1.msra.mxu0 %v186
    %609 = vmatprep.subr.mxu0 %v191
    %610 = vmatpush1.msra.mxu0 %v190
    %611 = vmatprep.subr.mxu0 %v195
    %612 = vmatpush1.msra.mxu0 %v194
    %613 = vmatprep.subr.mxu0 %v199
    %614 = vmatpush1.msra.mxu0 %v198
    %615 = vmatprep.subr.mxu0 %v203
    %616 = vmatpush1.msra.mxu0 %v202
    %617 = vmatprep.subr.mxu0 %v207
    %618 = vmatpush1.msra.mxu0 %v206
    %619 = vmatprep.subr.mxu0 %v211
    %620 = vmatpush1.msra.mxu0 %v210
    %621 = vmatprep.subr.mxu0 %v215
    %622 = vmatpush1.msra.mxu0 %v214
    %623 = vmatprep.subr.mxu0 %v219
    %624 = vmatpush1.msra.mxu0 %v218
    %625 = vmatprep.subr.mxu0 %v223
    %626 = vmatpush1.msra.mxu0 %v222
    %627 = vmatprep.subr.mxu0 %v227
    %628 = vmatpush1.msra.mxu0 %v226
    %629 = vmatprep.subr.mxu0 %v231
    %630 = vmatpush1.msra.mxu0 %v230
    %631 = vmatprep.subr.mxu0 %v235
    %632 = vmatpush1.msra.mxu0 %v234
    %633 = vmatprep.subr.mxu0 %v239
    %634 = vmatpush1.msra.mxu0 %v238
    %635 = vmatprep.subr.mxu0 %v243
    %636 = vmatpush1.msra.mxu0 %v242
    %637 = vmatprep.subr.mxu0 %v247
    %638 = vmatpush1.msra.mxu0 %v246
    %639 = vmatprep.subr.mxu0 %v251
    %640 = vmatpush1.msra.mxu0 %v250
    %641 = vmatprep.subr.mxu0 %v255
    %642 = vmatpush1.msra.mxu0 %v254
    %643 = vmatprep.subr.mxu0 %v259
    %644 = vmatpush1.msra.mxu0 %v258
    %645 = vmatprep.subr.mxu0 %v263
    %646 = vmatpush1.msra.mxu0 %v262
    %647 = vmatprep.subr.mxu0 %v267
    %648 = vmatpush1.msra.mxu0 %v266
    %649 = vmatprep.subr.mxu0 %v271
    %650 = vmatpush1.msra.mxu0 %v270
    %651 = vmatprep.subr.mxu0 %v275
    %652 = vmatpush1.msra.mxu0 %v274
    %653 = vmatprep.subr.mxu0 %v279
    %654 = vmatpush1.msra.mxu0 %v278
    %655 = vmatprep.subr.mxu0 %v283
    %656 = vmatpush1.msra.mxu0 %v282
    %657 = vmatprep.subr.mxu0 %v287
    %658 = vmatpush1.msra.mxu0 %v286
    %659 = vmatprep.subr.mxu0 %v291
    %660 = vmatpush1.msra.mxu0 %v290
    %661 = vmatprep.subr.mxu0 %v295
    %662 = vmatpush1.msra.mxu0 %v294
    %663 = vmatprep.subr.mxu0 %v299
    %664 = vmatpush1.msra.mxu0 %v298
    %665 = vmatprep.mubr.f32.mxu0 %v147
    %666 = vmatmul.mubr.f32.gmra.mrb[0].mxu0 %v146
    %v667 = vpop.f32.mrb[0].mxu0
    %v668 = vadd.f32 %v571, %v667
    %v669 = vpop.f32.mrb[0].mxu0
    %v670 = vadd.f32 %v575, %v669
    %671 = vmatprep.mubr.f32.mxu0 %v154
    %672 = vmatmul.mubr.f32.gmra.mrb[0].mxu0 %v153
    %v673 = vpop.f32.mrb[0].mxu0
    %v674 = vadd.f32 %v571, %v673
    %v675 = vpop.f32.mrb[0].mxu0
    %v676 = vadd.f32 %v575, %v675
    %677 = vmatprep.mubr.f32.mxu0 %v161
    %678 = vmatmul.mubr.f32.gmra.mrb[0].mxu0 %v160
    %v679 = vpop.f32.mrb[0].mxu0
    %v680 = vadd.f32 %v571, %v679
    %v681 = vpop.f32.mrb[0].mxu0
    %v682 = vadd.f32 %v575, %v681
    %683 = vmatprep.mubr.f32.mxu0 %v168
    %684 = vmatmul.mubr.f32.gmra.mrb[0].mxu0 %v167
    %v685 = vpop.f32.mrb[0].mxu0
    %v686 = vadd.f32 %v571, %v685
    %v687 = vpop.f32.mrb[0].mxu0
    %v688 = vadd.f32 %v575, %v687
    %689 = vdwg.mxu0
    %690 = vmatprep.subr.mxu0 %v303
    %691 = vmatpush1.msra.mxu0 %v302
    %692 = vmatprep.subr.mxu0 %v307
    %693 = vmatpush1.msra.mxu0 %v306
    %694 = vmatprep.subr.mxu0 %v311
    %695 = vmatpush1.msra.mxu0 %v310
    %696 = vmatprep.subr.mxu0 %v315
    %697 = vmatpush1.msra.mxu0 %v314
    %698 = vmatprep.subr.mxu0 %v319
    %699 = vmatpush1.msra.mxu0 %v318
    %700 = vmatprep.subr.mxu0 %v323
    %701 = vmatpush1.msra.mxu0 %v322
    %702 = vmatprep.subr.mxu0 %v327
    %703 = vmatpush1.msra.mxu0 %v326
    %704 = vmatprep.subr.mxu0 %v331
    %705 = vmatpush1.msra.mxu0 %v330
    %706 = vmatprep.subr.mxu0 %v335
    %707 = vmatpush1.msra.mxu0 %v334
    %708 = vmatprep.subr.mxu0 %v339
    %709 = vmatpush1.msra.mxu0 %v338
    %710 = vmatprep.subr.mxu0 %v343
    %711 = vmatpush1.msra.mxu0 %v342
    %712 = vmatprep.subr.mxu0 %v347
    %713 = vmatpush1.msra.mxu0 %v346
    %714 = vmatprep.subr.mxu0 %v351
    %715 = vmatpush1.msra.mxu0 %v350
    %716 = vmatprep.subr.mxu0 %v355
    %717 = vmatpush1.msra.mxu0 %v354
    %718 = vmatprep.subr.mxu0 %v359
    %719 = vmatpush1.msra.mxu0 %v358
    %720 = vmatprep.subr.mxu0 %v363
    %721 = vmatpush1.msra.mxu0 %v362
    %722 = vmatprep.subr.mxu0 %v367
    %723 = vmatpush1.msra.mxu0 %v366
    %724 = vmatprep.subr.mxu0 %v371
    %725 = vmatpush1.msra.mxu0 %v370
    %726 = vmatprep.subr.mxu0 %v375
    %727 = vmatpush1.msra.mxu0 %v374
    %728 = vmatprep.subr.mxu0 %v379
    %729 = vmatpush1.msra.mxu0 %v378
    %730 = vmatprep.subr.mxu0 %v383
    %731 = vmatpush1.msra.mxu0 %v382
    %732 = vmatprep.subr.mxu0 %v387
    %733 = vmatpush1.msra.mxu0 %v386
    %734 = vmatprep.subr.mxu0 %v391
    %735 = vmatpush1.msra.mxu0 %v390
    %736 = vmatprep.subr.mxu0 %v395
    %737 = vmatpush1.msra.mxu0 %v394
    %738 = vmatprep.subr.mxu0 %v399
    %739 = vmatpush1.msra.mxu0 %v398
    %740 = vmatprep.subr.mxu0 %v403
    %741 = vmatpush1.msra.mxu0 %v402
    %742 = vmatprep.subr.mxu0 %v407
    %743 = vmatpush1.msra.mxu0 %v406
    %744 = vmatprep.subr.mxu0 %v411
    %745 = vmatpush1.msra.mxu0 %v410
    %746 = vmatprep.subr.mxu0 %v415
    %747 = vmatpush1.msra.mxu0 %v414
    %748 = vmatprep.subr.mxu0 %v419
    %749 = vmatpush1.msra.mxu0 %v418
    %750 = vmatprep.subr.mxu0 %v423
    %751 = vmatpush1.msra.mxu0 %v422
    %752 = vmatprep.subr.mxu0 %v427
    %753 = vmatpush1.msra.mxu0 %v426
    %754 = vmatprep.mubr.f32.mxu0 %v149
    %755 = vmatmul.mubr.f32.gmra.mrb[0].mxu0 %v148
    %v756 = vpop.f32.mrb[0].mxu0
    %v757 = vadd.f32 %v668, %v756
    %v758 = vpop.f32.mrb[0].mxu0
    %v759 = vadd.f32 %v670, %v758
    %760 = vmatprep.mubr.f32.mxu0 %v156
    %761 = vmatmul.mubr.f32.gmra.mrb[0].mxu0 %v155
    %v762 = vpop.f32.mrb[0].mxu0
    %v763 = vadd.f32 %v674, %v762
    %v764 = vpop.f32.mrb[0].mxu0
    %v765 = vadd.f32 %v676, %v764
    %766 = vmatprep.mubr.f32.mxu0 %v163
    %767 = vmatmul.mubr.f32.gmra.mrb[0].mxu0 %v162
    %v768 = vpop.f32.mrb[0].mxu0
    %v769 = vadd.f32 %v680, %v768
    %v770 = vpop.f32.mrb[0].mxu0
    %v771 = vadd.f32 %v682, %v770
    %772 = vmatprep.mubr.f32.mxu0 %v170
    %773 = vmatmul.mubr.f32.gmra.mrb[0].mxu0 %v169
    %v774 = vpop.f32.mrb[0].mxu0
    %v775 = vadd.f32 %v686, %v774
    %v776 = vpop.f32.mrb[0].mxu0
    %v777 = vadd.f32 %v688, %v776
    %778 = vdwg.mxu0
    %779 = vmatprep.subr.mxu0 %v431
    %780 = vmatpush1.msra.mxu0 %v430
    %781 = vmatprep.subr.mxu0 %v435
    %782 = vmatpush1.msra.mxu0 %v434
    %783 = vmatprep.subr.mxu0 %v439
    %784 = vmatpush1.msra.mxu0 %v438
    %785 = vmatprep.subr.mxu0 %v443
    %786 = vmatpush1.msra.mxu0 %v442
    %787 = vmatprep.subr.mxu0 %v447
    %788 = vmatpush1.msra.mxu0 %v446
    %789 = vmatprep.subr.mxu0 %v451
    %790 = vmatpush1.msra.mxu0 %v450
    %791 = vmatprep.subr.mxu0 %v455
    %792 = vmatpush1.msra.mxu0 %v454
    %793 = vmatprep.subr.mxu0 %v459
    %794 = vmatpush1.msra.mxu0 %v458
    %795 = vmatprep.subr.mxu0 %v463
    %796 = vmatpush1.msra.mxu0 %v462
    %797 = vmatprep.subr.mxu0 %v467
    %798 = vmatpush1.msra.mxu0 %v466
    %799 = vmatprep.subr.mxu0 %v471
    %800 = vmatpush1.msra.mxu0 %v470
    %801 = vmatprep.subr.mxu0 %v475
    %802 = vmatpush1.msra.mxu0 %v474
    %803 = vmatprep.subr.mxu0 %v479
    %804 = vmatpush1.msra.mxu0 %v478
    %805 = vmatprep.subr.mxu0 %v483
    %806 = vmatpush1.msra.mxu0 %v482
    %807 = vmatprep.subr.mxu0 %v487
    %808 = vmatpush1.msra.mxu0 %v486
    %809 = vmatprep.subr.mxu0 %v491
    %810 = vmatpush1.msra.mxu0 %v490
    %811 = vmatprep.subr.mxu0 %v495
    %812 = vmatpush1.msra.mxu0 %v494
    %813 = vmatprep.subr.mxu0 %v499
    %814 = vmatpush1.msra.mxu0 %v498
    %815 = vmatprep.subr.mxu0 %v503
    %816 = vmatpush1.msra.mxu0 %v502
    %817 = vmatprep.subr.mxu0 %v507
    %818 = vmatpush1.msra.mxu0 %v506
    %819 = vmatprep.subr.mxu0 %v511
    %820 = vmatpush1.msra.mxu0 %v510
    %821 = vmatprep.subr.mxu0 %v515
    %822 = vmatpush1.msra.mxu0 %v514
    %823 = vmatprep.subr.mxu0 %v519
    %824 = vmatpush1.msra.mxu0 %v518
    %825 = vmatprep.subr.mxu0 %v523
    %826 = vmatpush1.msra.mxu0 %v522
    %827 = vmatprep.subr.mxu0 %v527
    %828 = vmatpush1.msra.mxu0 %v526
    %829 = vmatprep.subr.mxu0 %v531
    %830 = vmatpush1.msra.mxu0 %v530
    %831 = vmatprep.subr.mxu0 %v535
    %832 = vmatpush1.msra.mxu0 %v534
    %833 = vmatprep.subr.mxu0 %v539
    %834 = vmatpush1.msra.mxu0 %v538
    %835 = vmatprep.subr.mxu0 %v543
    %836 = vmatpush1.msra.mxu0 %v542
    %837 = vmatprep.subr.mxu0 %v547
    %838 = vmatpush1.msra.mxu0 %v546
    %839 = vmatprep.subr.mxu0 %v551
    %840 = vmatpush1.msra.mxu0 %v550
    %841 = vmatprep.subr.mxu0 %v555
    %842 = vmatpush1.msra.mxu0 %v554
    %843 = vmatprep.mubr.f32.mxu0 %v151
    %844 = vmatmul.mubr.f32.gmra.mrb[0].mxu0 %v150
    %v845 = vpop.f32.mrb[0].mxu0
    %v846 = vadd.f32 %v757, %v845
    %v847 = vpop.f32.mrb[0].mxu0
    %v848 = vadd.f32 %v759, %v847
    %849 = vmatprep.mubr.f32.mxu0 %v158
    %850 = vmatmul.mubr.f32.gmra.mrb[0].mxu0 %v157
    %v851 = vpop.f32.mrb[0].mxu0
    %v852 = vadd.f32 %v763, %v851
    %v853 = vpop.f32.mrb[0].mxu0
    %v854 = vadd.f32 %v765, %v853
    %855 = vmatprep.mubr.f32.mxu0 %v165
    %856 = vmatmul.mubr.f32.gmra.mrb[0].mxu0 %v164
    %v857 = vpop.f32.mrb[0].mxu0
    %v858 = vadd.f32 %v769, %v857
    %v859 = vpop.f32.mrb[0].mxu0
    %v860 = vadd.f32 %v771, %v859
    %861 = vmatprep.mubr.f32.mxu0 %v172
    %862 = vmatmul.mubr.f32.gmra.mrb[0].mxu0 %v171
    %v863 = vpop.f32.mrb[0].mxu0
    %v864 = vadd.f32 %v775, %v863
    %v865 = vpop.f32.mrb[0].mxu0
    %v866 = vadd.f32 %v777, %v865
    %867 = vdwg.mxu0
    %868 = vmatprep.subr.mxu0 %v559
    %869 = vmatpush1.msra.mxu0 %v558
    %870 = vmatprep.subr.mxu0 %v563
    %871 = vmatpush1.msra.mxu0 %v562
    %872 = vmatprep.subr.mxu0 0.0
    %873 = vmatpush1.msra.mxu0 0.0
    %874 = vmatprep.subr.mxu0 0.0
    %875 = vmatpush1.msra.mxu0 0.0
    %876 = vmatprep.subr.mxu0 0.0
    %877 = vmatpush1.msra.mxu0 0.0
    %878 = vmatprep.subr.mxu0 0.0
    %879 = vmatpush1.msra.mxu0 0.0
    %880 = vmatprep.subr.mxu0 0.0
    %881 = vmatpush1.msra.mxu0 0.0
    %882 = vmatprep.subr.mxu0 0.0
    %883 = vmatpush1.msra.mxu0 0.0
    %884 = vmatprep.subr.mxu0 0.0
    %885 = vmatpush1.msra.mxu0 0.0
    %886 = vmatprep.subr.mxu0 0.0
    %887 = vmatpush1.msra.mxu0 0.0
    %888 = vmatprep.subr.mxu0 0.0
    %889 = vmatpush1.msra.mxu0 0.0
    %890 = vmatprep.subr.mxu0 0.0
    %891 = vmatpush1.msra.mxu0 0.0
    %892 = vmatprep.subr.mxu0 0.0
    %893 = vmatpush1.msra.mxu0 0.0
    %894 = vmatprep.subr.mxu0 0.0
    %895 = vmatpush1.msra.mxu0 0.0
    %896 = vmatprep.subr.mxu0 0.0
    %897 = vmatpush1.msra.mxu0 0.0
    %898 = vmatprep.subr.mxu0 0.0
    %899 = vmatpush1.msra.mxu0 0.0
    %900 = vmatprep.subr.mxu0 0.0
    %901 = vmatpush1.msra.mxu0 0.0
    %902 = vmatprep.subr.mxu0 0.0
    %903 = vmatpush1.msra.mxu0 0.0
    %904 = vmatprep.subr.mxu0 0.0
    %905 = vmatpush1.msra.mxu0 0.0
    %906 = vmatprep.subr.mxu0 0.0
    %907 = vmatpush1.msra.mxu0 0.0
    %908 = vmatprep.subr.mxu0 0.0
    %909 = vmatpush1.msra.mxu0 0.0
    %910 = vmatprep.subr.mxu0 0.0
    %911 = vmatpush1.msra.mxu0 0.0
    %912 = vmatprep.subr.mxu0 0.0
    %913 = vmatpush1.msra.mxu0 0.0
    %914 = vmatprep.subr.mxu0 0.0
    %915 = vmatpush1.msra.mxu0 0.0
    %916 = vmatprep.subr.mxu0 0.0
    %917 = vmatpush1.msra.mxu0 0.0
    %918 = vmatprep.subr.mxu0 0.0
    %919 = vmatpush1.msra.mxu0 0.0
    %920 = vmatprep.subr.mxu0 0.0
    %921 = vmatpush1.msra.mxu0 0.0
    %922 = vmatprep.subr.mxu0 0.0
    %923 = vmatpush1.msra.mxu0 0.0
    %924 = vmatprep.subr.mxu0 0.0
    %925 = vmatpush1.msra.mxu0 0.0
    %926 = vmatprep.subr.mxu0 0.0
    %927 = vmatpush1.msra.mxu0 0.0
    %928 = vmatprep.subr.mxu0 0.0
    %929 = vmatpush1.msra.mxu0 0.0
    %930 = vmatprep.subr.mxu0 0.0
    %931 = vmatpush1.msra.mxu0 0.0
    %932 = vmatprep.mubr.f32.mxu0 0.0
    %933 = vmatmul.mubr.f32.gmra.mrb[0].mxu0 %v590
    %v934 = vpop.f32.mrb[0].mxu0
    %v935 = vadd.f32 %v846, %v934
    %v936 = vpop.f32.mrb[0].mxu0
    %v937 = vadd.f32 %v848, %v936
    %938 = vmatprep.mubr.f32.mxu0 0.0
    %939 = vmatmul.mubr.f32.gmra.mrb[0].mxu0 %v593
    %v940 = vpop.f32.mrb[0].mxu0
    %v941 = vadd.f32 %v852, %v940
    %v942 = vpop.f32.mrb[0].mxu0
    %v943 = vadd.f32 %v854, %v942
    %944 = vmatprep.mubr.f32.mxu0 0.0
    %945 = vmatmul.mubr.f32.gmra.mrb[0].mxu0 %v596
    %v946 = vpop.f32.mrb[0].mxu0
    %v947 = vadd.f32 %v858, %v946
    %v948 = vpop.f32.mrb[0].mxu0
    %v949 = vadd.f32 %v860, %v948
    %950 = vmatprep.mubr.f32.mxu0 0.0
    %951 = vmatmul.mubr.f32.gmra.mrb[0].mxu0 %v599
    %v952 = vpop.f32.mrb[0].mxu0
    %v953 = vadd.f32 %v864, %v952
    %v954 = vpop.f32.mrb[0].mxu0
    %v955 = vadd.f32 %v866, %v954
    %956 = vdwg.mxu0
    %957 = vmatprep.subr.mxu0 %v177
    %958 = vmatpush1.msra.mxu0 %v176
    %959 = vmatprep.subr.mxu0 %v181
    %960 = vmatpush1.msra.mxu0 %v180
    %961 = vmatprep.subr.mxu0 %v185
    %962 = vmatpush1.msra.mxu0 %v184
    %963 = vmatprep.subr.mxu0 %v189
    %964 = vmatpush1.msra.mxu0 %v188
    %965 = vmatprep.subr.mxu0 %v193
    %966 = vmatpush1.msra.mxu0 %v192
    %967 = vmatprep.subr.mxu0 %v197
    %968 = vmatpush1.msra.mxu0 %v196
    %969 = vmatprep.subr.mxu0 %v201
    %970 = vmatpush1.msra.mxu0 %v200
    %971 = vmatprep.subr.mxu0 %v205
    %972 = vmatpush1.msra.mxu0 %v204
    %973 = vmatprep.subr.mxu0 %v209
    %974 = vmatpush1.msra.mxu0 %v208
    %975 = vmatprep.subr.mxu0 %v213
    %976 = vmatpush1.msra.mxu0 %v212
    %977 = vmatprep.subr.mxu0 %v217
    %978 = vmatpush1.msra.mxu0 %v216
    %979 = vmatprep.subr.mxu0 %v221
    %980 = vmatpush1.msra.mxu0 %v220
    %981 = vmatprep.subr.mxu0 %v225
    %982 = vmatpush1.msra.mxu0 %v224
    %983 = vmatprep.subr.mxu0 %v229
    %984 = vmatpush1.msra.mxu0 %v228
    %985 = vmatprep.subr.mxu0 %v233
    %986 = vmatpush1.msra.mxu0 %v232
    %987 = vmatprep.subr.mxu0 %v237
    %988 = vmatpush1.msra.mxu0 %v236
    %989 = vmatprep.subr.mxu0 %v241
    %990 = vmatpush1.msra.mxu0 %v240
    %991 = vmatprep.subr.mxu0 %v245
    %992 = vmatpush1.msra.mxu0 %v244
    %993 = vmatprep.subr.mxu0 %v249
    %994 = vmatpush1.msra.mxu0 %v248
    %995 = vmatprep.subr.mxu0 %v253
    %996 = vmatpush1.msra.mxu0 %v252
    %997 = vmatprep.subr.mxu0 %v257
    %998 = vmatpush1.msra.mxu0 %v256
    %999 = vmatprep.subr.mxu0 %v261
    %1000 = vmatpush1.msra.mxu0 %v260
    %1001 = vmatprep.subr.mxu0 %v265
    %1002 = vmatpush1.msra.mxu0 %v264
    %1003 = vmatprep.subr.mxu0 %v269
    %1004 = vmatpush1.msra.mxu0 %v268
    %1005 = vmatprep.subr.mxu0 %v273
    %1006 = vmatpush1.msra.mxu0 %v272
    %1007 = vmatprep.subr.mxu0 %v277
    %1008 = vmatpush1.msra.mxu0 %v276
    %1009 = vmatprep.subr.mxu0 %v281
    %1010 = vmatpush1.msra.mxu0 %v280
    %1011 = vmatprep.subr.mxu0 %v285
    %1012 = vmatpush1.msra.mxu0 %v284
    %1013 = vmatprep.subr.mxu0 %v289
    %1014 = vmatpush1.msra.mxu0 %v288
    %1015 = vmatprep.subr.mxu0 %v293
    %1016 = vmatpush1.msra.mxu0 %v292
    %1017 = vmatprep.subr.mxu0 %v297
    %1018 = vmatpush1.msra.mxu0 %v296
    %1019 = vmatprep.subr.mxu0 %v301
    %1020 = vmatpush1.msra.mxu0 %v300
    %1021 = vmatprep.mubr.f32.mxu0 %v147
    %1022 = vmatmul.mubr.f32.gmra.mrb[0].mxu0 %v146
    %v1023 = vpop.f32.mrb[0].mxu0
    %v1024 = vadd.f32 %v579, %v1023
    %v1025 = vpop.f32.mrb[0].mxu0
    %v1026 = vadd.f32 %v583, %v1025
    %1027 = vmatprep.mubr.f32.mxu0 %v154
    %1028 = vmatmul.mubr.f32.gmra.mrb[0].mxu0 %v153
    %v1029 = vpop.f32.mrb[0].mxu0
    %v1030 = vadd.f32 %v579, %v1029
    %v1031 = vpop.f32.mrb[0].mxu0
    %v1032 = vadd.f32 %v583, %v1031
    %1033 = vmatprep.mubr.f32.mxu0 %v161
    %1034 = vmatmul.mubr.f32.gmra.mrb[0].mxu0 %v160
    %v1035 = vpop.f32.mrb[0].mxu0
    %v1036 = vadd.f32 %v579, %v1035
    %v1037 = vpop.f32.mrb[0].mxu0
    %v1038 = vadd.f32 %v583, %v1037
    %1039 = vmatprep.mubr.f32.mxu0 %v168
    %1040 = vmatmul.mubr.f32.gmra.mrb[0].mxu0 %v167
    %v1041 = vpop.f32.mrb[0].mxu0
    %v1042 = vadd.f32 %v579, %v1041
    %v1043 = vpop.f32.mrb[0].mxu0
    %v1044 = vadd.f32 %v583, %v1043
    %1045 = vdwg.mxu0
    %1046 = vmatprep.subr.mxu0 %v305
    %1047 = vmatpush1.msra.mxu0 %v304
    %1048 = vmatprep.subr.mxu0 %v309
    %1049 = vmatpush1.msra.mxu0 %v308
    %1050 = vmatprep.subr.mxu0 %v313
    %1051 = vmatpush1.msra.mxu0 %v312
    %1052 = vmatprep.subr.mxu0 %v317
    %1053 = vmatpush1.msra.mxu0 %v316
    %1054 = vmatprep.subr.mxu0 %v321
    %1055 = vmatpush1.msra.mxu0 %v320
    %1056 = vmatprep.subr.mxu0 %v325
    %1057 = vmatpush1.msra.mxu0 %v324
    %1058 = vmatprep.subr.mxu0 %v329
    %1059 = vmatpush1.msra.mxu0 %v328
    %1060 = vmatprep.subr.mxu0 %v333
    %1061 = vmatpush1.msra.mxu0 %v332
    %1062 = vmatprep.subr.mxu0 %v337
    %1063 = vmatpush1.msra.mxu0 %v336
    %1064 = vmatprep.subr.mxu0 %v341
    %1065 = vmatpush1.msra.mxu0 %v340
    %1066 = vmatprep.subr.mxu0 %v345
    %1067 = vmatpush1.msra.mxu0 %v344
    %1068 = vmatprep.subr.mxu0 %v349
    %1069 = vmatpush1.msra.mxu0 %v348
    %1070 = vmatprep.subr.mxu0 %v353
    %1071 = vmatpush1.msra.mxu0 %v352
    %1072 = vmatprep.subr.mxu0 %v357
    %1073 = vmatpush1.msra.mxu0 %v356
    %1074 = vmatprep.subr.mxu0 %v361
    %1075 = vmatpush1.msra.mxu0 %v360
    %1076 = vmatprep.subr.mxu0 %v365
    %1077 = vmatpush1.msra.mxu0 %v364
    %1078 = vmatprep.subr.mxu0 %v369
    %1079 = vmatpush1.msra.mxu0 %v368
    %1080 = vmatprep.subr.mxu0 %v373
    %1081 = vmatpush1.msra.mxu0 %v372
    %1082 = vmatprep.subr.mxu0 %v377
    %1083 = vmatpush1.msra.mxu0 %v376
    %1084 = vmatprep.subr.mxu0 %v381
    %1085 = vmatpush1.msra.mxu0 %v380
    %1086 = vmatprep.subr.mxu0 %v385
    %1087 = vmatpush1.msra.mxu0 %v384
    %1088 = vmatprep.subr.mxu0 %v389
    %1089 = vmatpush1.msra.mxu0 %v388
    %1090 = vmatprep.subr.mxu0 %v393
    %1091 = vmatpush1.msra.mxu0 %v392
    %1092 = vmatprep.subr.mxu0 %v397
    %1093 = vmatpush1.msra.mxu0 %v396
    %1094 = vmatprep.subr.mxu0 %v401
    %1095 = vmatpush1.msra.mxu0 %v400
    %1096 = vmatprep.subr.mxu0 %v405
    %1097 = vmatpush1.msra.mxu0 %v404
    %1098 = vmatprep.subr.mxu0 %v409
    %1099 = vmatpush1.msra.mxu0 %v408
    %1100 = vmatprep.subr.mxu0 %v413
    %1101 = vmatpush1.msra.mxu0 %v412
    %1102 = vmatprep.subr.mxu0 %v417
    %1103 = vmatpush1.msra.mxu0 %v416
    %1104 = vmatprep.subr.mxu0 %v421
    %1105 = vmatpush1.msra.mxu0 %v420
    %1106 = vmatprep.subr.mxu0 %v425
    %1107 = vmatpush1.msra.mxu0 %v424
    %1108 = vmatprep.subr.mxu0 %v429
    %1109 = vmatpush1.msra.mxu0 %v428
    %1110 = vmatprep.mubr.f32.mxu0 %v149
    %1111 = vmatmul.mubr.f32.gmra.mrb[0].mxu0 %v148
    %v1112 = vpop.f32.mrb[0].mxu0
    %v1113 = vadd.f32 %v1024, %v1112
    %v1114 = vpop.f32.mrb[0].mxu0
    %v1115 = vadd.f32 %v1026, %v1114
    %1116 = vmatprep.mubr.f32.mxu0 %v156
    %1117 = vmatmul.mubr.f32.gmra.mrb[0].mxu0 %v155
    %v1118 = vpop.f32.mrb[0].mxu0
    %v1119 = vadd.f32 %v1030, %v1118
    %v1120 = vpop.f32.mrb[0].mxu0
    %v1121 = vadd.f32 %v1032, %v1120
    %1122 = vmatprep.mubr.f32.mxu0 %v163
    %1123 = vmatmul.mubr.f32.gmra.mrb[0].mxu0 %v162
    %v1124 = vpop.f32.mrb[0].mxu0
    %v1125 = vadd.f32 %v1036, %v1124
    %v1126 = vpop.f32.mrb[0].mxu0
    %v1127 = vadd.f32 %v1038, %v1126
    %1128 = vmatprep.mubr.f32.mxu0 %v170
    %1129 = vmatmul.mubr.f32.gmra.mrb[0].mxu0 %v169
    %v1130 = vpop.f32.mrb[0].mxu0
    %v1131 = vadd.f32 %v1042, %v1130
    %v1132 = vpop.f32.mrb[0].mxu0
    %v1133 = vadd.f32 %v1044, %v1132
    %1134 = vdwg.mxu0
    %1135 = vmatprep.subr.mxu0 %v433
    %1136 = vmatpush1.msra.mxu0 %v432
    %1137 = vmatprep.subr.mxu0 %v437
    %1138 = vmatpush1.msra.mxu0 %v436
    %1139 = vmatprep.subr.mxu0 %v441
    %1140 = vmatpush1.msra.mxu0 %v440
    %1141 = vmatprep.subr.mxu0 %v445
    %1142 = vmatpush1.msra.mxu0 %v444
    %1143 = vmatprep.subr.mxu0 %v449
    %1144 = vmatpush1.msra.mxu0 %v448
    %1145 = vmatprep.subr.mxu0 %v453
    %1146 = vmatpush1.msra.mxu0 %v452
    %1147 = vmatprep.subr.mxu0 %v457
    %1148 = vmatpush1.msra.mxu0 %v456
    %1149 = vmatprep.subr.mxu0 %v461
    %1150 = vmatpush1.msra.mxu0 %v460
    %1151 = vmatprep.subr.mxu0 %v465
    %1152 = vmatpush1.msra.mxu0 %v464
    %1153 = vmatprep.subr.mxu0 %v469
    %1154 = vmatpush1.msra.mxu0 %v468
    %1155 = vmatprep.subr.mxu0 %v473
    %1156 = vmatpush1.msra.mxu0 %v472
    %1157 = vmatprep.subr.mxu0 %v477
    %1158 = vmatpush1.msra.mxu0 %v476
    %1159 = vmatprep.subr.mxu0 %v481
    %1160 = vmatpush1.msra.mxu0 %v480
    %1161 = vmatprep.subr.mxu0 %v485
    %1162 = vmatpush1.msra.mxu0 %v484
    %1163 = vmatprep.subr.mxu0 %v489
    %1164 = vmatpush1.msra.mxu0 %v488
    %1165 = vmatprep.subr.mxu0 %v493
    %1166 = vmatpush1.msra.mxu0 %v492
    %1167 = vmatprep.subr.mxu0 %v497
    %1168 = vmatpush1.msra.mxu0 %v496
    %1169 = vmatprep.subr.mxu0 %v501
    %1170 = vmatpush1.msra.mxu0 %v500
    %1171 = vmatprep.subr.mxu0 %v505
    %1172 = vmatpush1.msra.mxu0 %v504
    %1173 = vmatprep.subr.mxu0 %v509
    %1174 = vmatpush1.msra.mxu0 %v508
    %1175 = vmatprep.subr.mxu0 %v513
    %1176 = vmatpush1.msra.mxu0 %v512
    %1177 = vmatprep.subr.mxu0 %v517
    %1178 = vmatpush1.msra.mxu0 %v516
    %1179 = vmatprep.subr.mxu0 %v521
    %1180 = vmatpush1.msra.mxu0 %v520
    %1181 = vmatprep.subr.mxu0 %v525
    %1182 = vmatpush1.msra.mxu0 %v524
    %1183 = vmatprep.subr.mxu0 %v529
    %1184 = vmatpush1.msra.mxu0 %v528
    %1185 = vmatprep.subr.mxu0 %v533
    %1186 = vmatpush1.msra.mxu0 %v532
    %1187 = vmatprep.subr.mxu0 %v537
    %1188 = vmatpush1.msra.mxu0 %v536
    %1189 = vmatprep.subr.mxu0 %v541
    %1190 = vmatpush1.msra.mxu0 %v540
    %1191 = vmatprep.subr.mxu0 %v545
    %1192 = vmatpush1.msra.mxu0 %v544
    %1193 = vmatprep.subr.mxu0 %v549
    %1194 = vmatpush1.msra.mxu0 %v548
    %1195 = vmatprep.subr.mxu0 %v553
    %1196 = vmatpush1.msra.mxu0 %v552
    %1197 = vmatprep.subr.mxu0 %v557
    %1198 = vmatpush1.msra.mxu0 %v556
    %1199 = vmatprep.mubr.f32.mxu0 %v151
    %1200 = vmatmul.mubr.f32.gmra.mrb[0].mxu0 %v150
    %v1201 = vpop.f32.mrb[0].mxu0
    %v1202 = vadd.f32 %v1113, %v1201
    %v1203 = vpop.f32.mrb[0].mxu0
    %v1204 = vadd.f32 %v1115, %v1203
    %1205 = vmatprep.mubr.f32.mxu0 %v158
    %1206 = vmatmul.mubr.f32.gmra.mrb[0].mxu0 %v157
    %v1207 = vpop.f32.mrb[0].mxu0
    %v1208 = vadd.f32 %v1119, %v1207
    %v1209 = vpop.f32.mrb[0].mxu0
    %v1210 = vadd.f32 %v1121, %v1209
    %1211 = vmatprep.mubr.f32.mxu0 %v165
    %1212 = vmatmul.mubr.f32.gmra.mrb[0].mxu0 %v164
    %v1213 = vpop.f32.mrb[0].mxu0
    %v1214 = vadd.f32 %v1125, %v1213
    %v1215 = vpop.f32.mrb[0].mxu0
    %v1216 = vadd.f32 %v1127, %v1215
    %1217 = vmatprep.mubr.f32.mxu0 %v172
    %1218 = vmatmul.mubr.f32.gmra.mrb[0].mxu0 %v171
    %v1219 = vpop.f32.mrb[0].mxu0
    %v1220 = vadd.f32 %v1131, %v1219
    %v1221 = vpop.f32.mrb[0].mxu0
    %v1222 = vadd.f32 %v1133, %v1221
    %1223 = vdwg.mxu0
    %1224 = vmatprep.subr.mxu0 %v561
    %1225 = vmatpush1.msra.mxu0 %v560
    %1226 = vmatprep.subr.mxu0 %v565
    %1227 = vmatpush1.msra.mxu0 %v564
    %1228 = vmatprep.subr.mxu0 0.0
    %1229 = vmatpush1.msra.mxu0 0.0
    %1230 = vmatprep.subr.mxu0 0.0
    %1231 = vmatpush1.msra.mxu0 0.0
    %1232 = vmatprep.subr.mxu0 0.0
    %1233 = vmatpush1.msra.mxu0 0.0
    %1234 = vmatprep.subr.mxu0 0.0
    %1235 = vmatpush1.msra.mxu0 0.0
    %1236 = vmatprep.subr.mxu0 0.0
    %1237 = vmatpush1.msra.mxu0 0.0
    %1238 = vmatprep.subr.mxu0 0.0
    %1239 = vmatpush1.msra.mxu0 0.0
    %1240 = vmatprep.subr.mxu0 0.0
    %1241 = vmatpush1.msra.mxu0 0.0
    %1242 = vmatprep.subr.mxu0 0.0
    %1243 = vmatpush1.msra.mxu0 0.0
    %1244 = vmatprep.subr.mxu0 0.0
    %1245 = vmatpush1.msra.mxu0 0.0
    %1246 = vmatprep.subr.mxu0 0.0
    %1247 = vmatpush1.msra.mxu0 0.0
    %1248 = vmatprep.subr.mxu0 0.0
    %1249 = vmatpush1.msra.mxu0 0.0
    %1250 = vmatprep.subr.mxu0 0.0
    %1251 = vmatpush1.msra.mxu0 0.0
    %1252 = vmatprep.subr.mxu0 0.0
    %1253 = vmatpush1.msra.mxu0 0.0
    %1254 = vmatprep.subr.mxu0 0.0
    %1255 = vmatpush1.msra.mxu0 0.0
    %1256 = vmatprep.subr.mxu0 0.0
    %1257 = vmatpush1.msra.mxu0 0.0
    %1258 = vmatprep.subr.mxu0 0.0
    %1259 = vmatpush1.msra.mxu0 0.0
    %1260 = vmatprep.subr.mxu0 0.0
    %1261 = vmatpush1.msra.mxu0 0.0
    %1262 = vmatprep.subr.mxu0 0.0
    %1263 = vmatpush1.msra.mxu0 0.0
    %1264 = vmatprep.subr.mxu0 0.0
    %1265 = vmatpush1.msra.mxu0 0.0
    %1266 = vmatprep.subr.mxu0 0.0
    %1267 = vmatpush1.msra.mxu0 0.0
    %1268 = vmatprep.subr.mxu0 0.0
    %1269 = vmatpush1.msra.mxu0 0.0
    %1270 = vmatprep.subr.mxu0 0.0
    %1271 = vmatpush1.msra.mxu0 0.0
    %1272 = vmatprep.subr.mxu0 0.0
    %1273 = vmatpush1.msra.mxu0 0.0
    %1274 = vmatprep.subr.mxu0 0.0
    %1275 = vmatpush1.msra.mxu0 0.0
    %1276 = vmatprep.subr.mxu0 0.0
    %1277 = vmatpush1.msra.mxu0 0.0
    %1278 = vmatprep.subr.mxu0 0.0
    %1279 = vmatpush1.msra.mxu0 0.0
    %1280 = vmatprep.subr.mxu0 0.0
    %1281 = vmatpush1.msra.mxu0 0.0
    %1282 = vmatprep.subr.mxu0 0.0
    %1283 = vmatpush1.msra.mxu0 0.0
    %1284 = vmatprep.subr.mxu0 0.0
    %1285 = vmatpush1.msra.mxu0 0.0
    %1286 = vmatprep.subr.mxu0 0.0
    %1287 = vmatpush1.msra.mxu0 0.0
    %1288 = vmatprep.mubr.f32.mxu0 0.0
    %1289 = vmatmul.mubr.f32.gmra.mrb[0].mxu0 %v590
    %v1290 = vpop.f32.mrb[0].mxu0
    %v1291 = vadd.f32 %v1202, %v1290
    %v1292 = vpop.f32.mrb[0].mxu0
    %v1293 = vadd.f32 %v1204, %v1292
    %1294 = vmatprep.mubr.f32.mxu0 0.0
    %1295 = vmatmul.mubr.f32.gmra.mrb[0].mxu0 %v593
    %v1296 = vpop.f32.mrb[0].mxu0
    %v1297 = vadd.f32 %v1208, %v1296
    %v1298 = vpop.f32.mrb[0].mxu0
    %v1299 = vadd.f32 %v1210, %v1298
    %1300 = vmatprep.mubr.f32.mxu0 0.0
    %1301 = vmatmul.mubr.f32.gmra.mrb[0].mxu0 %v596
    %v1302 = vpop.f32.mrb[0].mxu0
    %v1303 = vadd.f32 %v1214, %v1302
    %v1304 = vpop.f32.mrb[0].mxu0
    %v1305 = vadd.f32 %v1216, %v1304
    %1306 = vmatprep.mubr.f32.mxu0 0.0
    %1307 = vmatmul.mubr.f32.gmra.mrb[0].mxu0 %v599
    %v1308 = vpop.f32.mrb[0].mxu0
    %v1309 = vadd.f32 %v1220, %v1308
    %v1310 = vpop.f32.mrb[0].mxu0
    %v1311 = vadd.f32 %v1222, %v1310
    %1312 = vdwg.mxu0
    %v1313 = vmax.f32 %v935, 0.0
    %v1314 = vmax.f32 %v937, 0.0
    %v1315 = vmax.f32 %v1291, 0.0
    %v1316 = vmax.f32 %v1293, 0.0
    %v1317 = vmax.f32 %v941, 0.0
    %v1318 = vmax.f32 %v943, 0.0
    %v1319 = vmax.f32 %v1297, 0.0
    %v1320 = vmax.f32 %v1299, 0.0
    %v1321 = vmax.f32 %v947, 0.0
    %v1322 = vmax.f32 %v949, 0.0
    %v1323 = vmax.f32 %v1303, 0.0
    %v1324 = vmax.f32 %v1305, 0.0
    %v1325 = vmax.f32 %v953, 0.0
    %v1326 = vmax.f32 %v955, 0.0
    %v1327 = vmax.f32 %v1309, 0.0
    %v1328 = vmax.f32 %v1311, 0.0
    %v1329 = vld [vmem:[#allocation7] sm:$0xff]
    %v1330 = vld [vmem:[#allocation7 + $0x8] sm:$0xff]
    %v1331 = vld [vmem:[#allocation7 + $0x10] sm:$0xff]
    %v1332 = vld [vmem:[#allocation7 + $0x18] sm:$0xff]
    %v1333 = vld [vmem:[#allocation7 + $0x20] sm:$0xff]
    %v1334 = vld [vmem:[#allocation7 + $0x28] sm:$0xff]
    %v1335 = vld [vmem:[#allocation7 + $0x30] sm:$0xff]
    %v1336 = vld [vmem:[#allocation7 + $0x38] sm:$0xff]
    %v1337 = vld [vmem:[#allocation7 + $0x40] sm:$0xff]
    %v1338 = vld [vmem:[#allocation7 + $0x48] sm:$0xff]
    %v1339 = vld [vmem:[#allocation7 + $0x50] sm:$0xff]
    %v1340 = vld [vmem:[#allocation7 + $0x58] sm:$0xff]
    %v1341 = vld [vmem:[#allocation7 + $0x60] sm:$0xff]
    %v1342 = vld [vmem:[#allocation7 + $0x68] sm:$0xff]
    %v1343 = vld [vmem:[#allocation7 + $0x70] sm:$0xff]
    %v1344 = vld [vmem:[#allocation7 + $0x78] sm:$0xff]
    %v1345 = vld [vmem:[#allocation7 + $0x80] sm:$0xff]
    %v1346 = vld [vmem:[#allocation7 + $0x88] sm:$0xff]
    %v1347 = vld [vmem:[#allocation7 + $0x90] sm:$0xff]
    %v1348 = vld [vmem:[#allocation7 + $0x98] sm:$0xff]
    %v1349 = vld [vmem:[#allocation7 + $0xa0] sm:$0xff]
    %v1350 = vld [vmem:[#allocation7 + $0xa8] sm:$0xff]
    %v1351 = vld [vmem:[#allocation7 + $0xb0] sm:$0xff]
    %v1352 = vld [vmem:[#allocation7 + $0xb8] sm:$0xff]
    %v1353 = vld [vmem:[#allocation7 + $0xc0] sm:$0xff]
    %v1354 = vld [vmem:[#allocation7 + $0xc8] sm:$0xff]
    %v1355 = vld [vmem:[#allocation7 + $0xd0] sm:$0xff]
    %v1356 = vld [vmem:[#allocation7 + $0xd8] sm:$0xff]
    %v1357 = vld [vmem:[#allocation7 + $0xe0] sm:$0xff]
    %v1358 = vld [vmem:[#allocation7 + $0xe8] sm:$0xff]
    %v1359 = vld [vmem:[#allocation7 + $0xf0] sm:$0xff]
    %v1360 = vld [vmem:[#allocation7 + $0xf8] sm:$0xff]
    %v1361 = vld [vmem:[#allocation7 + $0x100] sm:$0xff]
    %v1362 = vld [vmem:[#allocation7 + $0x108] sm:$0xff]
    %v1363 = vld [vmem:[#allocation7 + $0x110] sm:$0xff]
    %v1364 = vld [vmem:[#allocation7 + $0x118] sm:$0xff]
    %v1365 = vld [vmem:[#allocation7 + $0x120] sm:$0xff]
    %v1366 = vld [vmem:[#allocation7 + $0x128] sm:$0xff]
    %v1367 = vld [vmem:[#allocation7 + $0x130] sm:$0xff]
    %v1368 = vld [vmem:[#allocation7 + $0x138] sm:$0xff]
    %v1369 = vld [vmem:[#allocation7 + $0x140] sm:$0xff]
    %v1370 = vld [vmem:[#allocation7 + $0x148] sm:$0xff]
    %v1371 = vld [vmem:[#allocation7 + $0x150] sm:$0xff]
    %v1372 = vld [vmem:[#allocation7 + $0x158] sm:$0xff]
    %v1373 = vld [vmem:[#allocation7 + $0x160] sm:$0xff]
    %v1374 = vld [vmem:[#allocation7 + $0x168] sm:$0xff]
    %v1375 = vld [vmem:[#allocation7 + $0x170] sm:$0xff]
    %v1376 = vld [vmem:[#allocation7 + $0x178] sm:$0xff]
    %v1377 = vld [vmem:[#allocation7 + $0x180] sm:$0xff]
    %v1378 = vld [vmem:[#allocation7 + $0x188] sm:$0xff]
    %v1379 = vld [vmem:[#allocation7 + $0x190] sm:$0xff]
    %v1380 = vld [vmem:[#allocation7 + $0x198] sm:$0xff]
    %v1381 = vld [vmem:[#allocation7 + $0x1a0] sm:$0xff]
    %v1382 = vld [vmem:[#allocation7 + $0x1a8] sm:$0xff]
    %v1383 = vld [vmem:[#allocation7 + $0x1b0] sm:$0xff]
    %v1384 = vld [vmem:[#allocation7 + $0x1b8] sm:$0xff]
    %v1385 = vld [vmem:[#allocation7 + $0x1c0] sm:$0xff]
    %v1386 = vld [vmem:[#allocation7 + $0x1c8] sm:$0xff]
    %v1387 = vld [vmem:[#allocation7 + $0x1d0] sm:$0xff]
    %v1388 = vld [vmem:[#allocation7 + $0x1d8] sm:$0xff]
    %v1389 = vld [vmem:[#allocation7 + $0x1e0] sm:$0xff]
    %v1390 = vld [vmem:[#allocation7 + $0x1e8] sm:$0xff]
    %v1391 = vld [vmem:[#allocation7 + $0x1f0] sm:$0xff]
    %v1392 = vld [vmem:[#allocation7 + $0x1f8] sm:$0xff]
    %v1393 = vld [vmem:[#allocation7 + $0x200] sm:$0xff]
    %v1394 = vld [vmem:[#allocation7 + $0x208] sm:$0xff]
    %v1395 = vld [vmem:[#allocation7 + $0x210] sm:$0xff]
    %v1396 = vld [vmem:[#allocation7 + $0x218] sm:$0xff]
    %v1397 = vld [vmem:[#allocation7 + $0x220] sm:$0xff]
    %v1398 = vld [vmem:[#allocation7 + $0x228] sm:$0xff]
    %v1399 = vld [vmem:[#allocation7 + $0x230] sm:$0xff]
    %v1400 = vld [vmem:[#allocation7 + $0x238] sm:$0xff]
    %v1401 = vld [vmem:[#allocation7 + $0x240] sm:$0xff]
    %v1402 = vld [vmem:[#allocation7 + $0x248] sm:$0xff]
    %v1403 = vld [vmem:[#allocation7 + $0x250] sm:$0xff]
    %v1404 = vld [vmem:[#allocation7 + $0x258] sm:$0xff]
    %v1405 = vld [vmem:[#allocation7 + $0x260] sm:$0xff]
    %v1406 = vld [vmem:[#allocation7 + $0x268] sm:$0xff]
    %v1407 = vld [vmem:[#allocation7 + $0x270] sm:$0xff]
    %v1408 = vld [vmem:[#allocation7 + $0x278] sm:$0xff]
    %v1409 = vld [vmem:[#allocation7 + $0x280] sm:$0xff]
    %v1410 = vld [vmem:[#allocation7 + $0x288] sm:$0xff]
    %v1411 = vld [vmem:[#allocation7 + $0x290] sm:$0xff]
    %v1412 = vld [vmem:[#allocation7 + $0x298] sm:$0xff]
    %v1413 = vld [vmem:[#allocation7 + $0x2a0] sm:$0xff]
    %v1414 = vld [vmem:[#allocation7 + $0x2a8] sm:$0xff]
    %v1415 = vld [vmem:[#allocation7 + $0x2b0] sm:$0xff]
    %v1416 = vld [vmem:[#allocation7 + $0x2b8] sm:$0xff]
    %v1417 = vld [vmem:[#allocation7 + $0x2c0] sm:$0xff]
    %v1418 = vld [vmem:[#allocation7 + $0x2c8] sm:$0xff]
    %v1419 = vld [vmem:[#allocation7 + $0x2d0] sm:$0xff]
    %v1420 = vld [vmem:[#allocation7 + $0x2d8] sm:$0xff]
    %v1421 = vld [vmem:[#allocation7 + $0x2e0] sm:$0xff]
    %v1422 = vld [vmem:[#allocation7 + $0x2e8] sm:$0xff]
    %v1423 = vld [vmem:[#allocation7 + $0x2f0] sm:$0xff]
    %v1424 = vld [vmem:[#allocation7 + $0x2f8] sm:$0xff]
    %v1425 = vld [vmem:[#allocation7 + $0x300] sm:$0xff]
    %v1426 = vld [vmem:[#allocation7 + $0x308] sm:$0xff]
    %v1427 = vld [vmem:[#allocation7 + $0x310] sm:$0xff]
    %v1428 = vld [vmem:[#allocation7 + $0x318] sm:$0xff]
    %v1429 = vld [vmem:[#allocation7 + $0x320] sm:$0xff]
    %v1430 = vld [vmem:[#allocation7 + $0x328] sm:$0xff]
    %v1431 = vld [vmem:[#allocation7 + $0x330] sm:$0xff]
    %v1432 = vld [vmem:[#allocation7 + $0x338] sm:$0xff]
    %v1433 = vld [vmem:[#allocation7 + $0x340] sm:$0xff]
    %v1434 = vld [vmem:[#allocation7 + $0x348] sm:$0xff]
    %v1435 = vld [vmem:[#allocation7 + $0x350] sm:$0xff]
    %v1436 = vld [vmem:[#allocation7 + $0x358] sm:$0xff]
    %v1437 = vld [vmem:[#allocation7 + $0x360] sm:$0xff]
    %v1438 = vld [vmem:[#allocation7 + $0x368] sm:$0xff]
    %v1439 = vld [vmem:[#allocation7 + $0x370] sm:$0xff]
    %v1440 = vld [vmem:[#allocation7 + $0x378] sm:$0xff]
    %v1441 = vld [vmem:[#allocation7 + $0x380] sm:$0xff]
    %v1442 = vld [vmem:[#allocation7 + $0x388] sm:$0xff]
    %v1443 = vld [vmem:[#allocation7 + $0x390] sm:$0xff]
    %v1444 = vld [vmem:[#allocation7 + $0x398] sm:$0xff]
    %v1445 = vld [vmem:[#allocation7 + $0x3a0] sm:$0xff]
    %v1446 = vld [vmem:[#allocation7 + $0x3a8] sm:$0xff]
    %v1447 = vld [vmem:[#allocation7 + $0x3b0] sm:$0xff]
    %v1448 = vld [vmem:[#allocation7 + $0x3b8] sm:$0xff]
    %v1449 = vld [vmem:[#allocation7 + $0x3c0] sm:$0xff]
    %v1450 = vld [vmem:[#allocation7 + $0x3c8] sm:$0xff]
    %v1451 = vld [vmem:[#allocation7 + $0x3d0] sm:$0xff]
    %v1452 = vld [vmem:[#allocation7 + $0x3d8] sm:$0xff]
    %v1453 = vld [vmem:[#allocation7 + $0x3e0] sm:$0xff]
    %v1454 = vld [vmem:[#allocation7 + $0x3e8] sm:$0xff]
    %v1455 = vld [vmem:[#allocation7 + $0x3f0] sm:$0xff]
    %v1456 = vld [vmem:[#allocation7 + $0x3f8] sm:$0xff]
    %v1457 = vld [vmem:[#allocation9] sm:$0x3]
    %v1459 = vlaneseq
    %v1460 = vshrl.u32 %v1459, 7
    %v1461 = vsub.s32 0, %v1460
    %v1462 = vrot.slane %v1457, %v1461
    %v1463 = vlaneseq
    %v1464 = vshrl.u32 %v1463, 7
    %v1465 = vsub.s32 1, %v1464
    %v1466 = vrot.slane %v1457, %v1465
    %1469 = vmatprep.subr.mxu0 %v1330
    %1470 = vmatpush1.msra.mxu0 %v1329
    %1471 = vmatprep.subr.mxu0 %v1332
    %1472 = vmatpush1.msra.mxu0 %v1331
    %1473 = vmatprep.subr.mxu0 %v1334
    %1474 = vmatpush1.msra.mxu0 %v1333
    %1475 = vmatprep.subr.mxu0 %v1336
    %1476 = vmatpush1.msra.mxu0 %v1335
    %1477 = vmatprep.subr.mxu0 %v1338
    %1478 = vmatpush1.msra.mxu0 %v1337
    %1479 = vmatprep.subr.mxu0 %v1340
    %1480 = vmatpush1.msra.mxu0 %v1339
    %1481 = vmatprep.subr.mxu0 %v1342
    %1482 = vmatpush1.msra.mxu0 %v1341
    %1483 = vmatprep.subr.mxu0 %v1344
    %1484 = vmatpush1.msra.mxu0 %v1343
    %1485 = vmatprep.subr.mxu0 %v1346
    %1486 = vmatpush1.msra.mxu0 %v1345
    %1487 = vmatprep.subr.mxu0 %v1348
    %1488 = vmatpush1.msra.mxu0 %v1347
    %1489 = vmatprep.subr.mxu0 %v1350
    %1490 = vmatpush1.msra.mxu0 %v1349
    %1491 = vmatprep.subr.mxu0 %v1352
    %1492 = vmatpush1.msra.mxu0 %v1351
    %1493 = vmatprep.subr.mxu0 %v1354
    %1494 = vmatpush1.msra.mxu0 %v1353
    %1495 = vmatprep.subr.mxu0 %v1356
    %1496 = vmatpush1.msra.mxu0 %v1355
    %1497 = vmatprep.subr.mxu0 %v1358
    %1498 = vmatpush1.msra.mxu0 %v1357
    %1499 = vmatprep.subr.mxu0 %v1360
    %1500 = vmatpush1.msra.mxu0 %v1359
    %1501 = vmatprep.subr.mxu0 %v1362
    %1502 = vmatpush1.msra.mxu0 %v1361
    %1503 = vmatprep.subr.mxu0 %v1364
    %1504 = vmatpush1.msra.mxu0 %v1363
    %1505 = vmatprep.subr.mxu0 %v1366
    %1506 = vmatpush1.msra.mxu0 %v1365
    %1507 = vmatprep.subr.mxu0 %v1368
    %1508 = vmatpush1.msra.mxu0 %v1367
    %1509 = vmatprep.subr.mxu0 %v1370
    %1510 = vmatpush1.msra.mxu0 %v1369
    %1511 = vmatprep.subr.mxu0 %v1372
    %1512 = vmatpush1.msra.mxu0 %v1371
    %1513 = vmatprep.subr.mxu0 %v1374
    %1514 = vmatpush1.msra.mxu0 %v1373
    %1515 = vmatprep.subr.mxu0 %v1376
    %1516 = vmatpush1.msra.mxu0 %v1375
    %1517 = vmatprep.subr.mxu0 %v1378
    %1518 = vmatpush1.msra.mxu0 %v1377
    %1519 = vmatprep.subr.mxu0 %v1380
    %1520 = vmatpush1.msra.mxu0 %v1379
    %1521 = vmatprep.subr.mxu0 %v1382
    %1522 = vmatpush1.msra.mxu0 %v1381
    %1523 = vmatprep.subr.mxu0 %v1384
    %1524 = vmatpush1.msra.mxu0 %v1383
    %1525 = vmatprep.subr.mxu0 %v1386
    %1526 = vmatpush1.msra.mxu0 %v1385
    %1527 = vmatprep.subr.mxu0 %v1388
    %1528 = vmatpush1.msra.mxu0 %v1387
    %1529 = vmatprep.subr.mxu0 %v1390
    %1530 = vmatpush1.msra.mxu0 %v1389
    %1531 = vmatprep.subr.mxu0 %v1392
    %1532 = vmatpush1.msra.mxu0 %v1391
    %1533 = vmatprep.mubr.f32.mxu0 %v1314
    %1534 = vmatmul.mubr.f32.gmra.mrb[0].mxu0 %v1313
    %v1535 = vpop.f32.mrb[0].mxu0
    %v1536 = vadd.f32 %v1462, %v1535
    %v1537 = vpop.f32.mrb[0].mxu0
    %v1538 = vadd.f32 %v1466, %v1537
    %1539 = vmatprep.mubr.f32.mxu0 %v1318
    %1540 = vmatmul.mubr.f32.gmra.mrb[0].mxu0 %v1317
    %v1541 = vpop.f32.mrb[0].mxu0
    %v1542 = vadd.f32 %v1462, %v1541
    %v1543 = vpop.f32.mrb[0].mxu0
    %v1544 = vadd.f32 %v1466, %v1543
    %1545 = vmatprep.mubr.f32.mxu0 %v1322
    %1546 = vmatmul.mubr.f32.gmra.mrb[0].mxu0 %v1321
    %v1547 = vpop.f32.mrb[0].mxu0
    %v1548 = vadd.f32 %v1462, %v1547
    %v1549 = vpop.f32.mrb[0].mxu0
    %v1550 = vadd.f32 %v1466, %v1549
    %1551 = vmatprep.mubr.f32.mxu0 %v1326
    %1552 = vmatmul.mubr.f32.gmra.mrb[0].mxu0 %v1325
    %v1553 = vpop.f32.mrb[0].mxu0
    %v1554 = vadd.f32 %v1462, %v1553
    %v1555 = vpop.f32.mrb[0].mxu0
    %v1556 = vadd.f32 %v1466, %v1555
    %1557 = vdwg.mxu0
    %1558 = vmatprep.subr.mxu0 %v1394
    %1559 = vmatpush1.msra.mxu0 %v1393
    %1560 = vmatprep.subr.mxu0 %v1396
    %1561 = vmatpush1.msra.mxu0 %v1395
    %1562 = vmatprep.subr.mxu0 %v1398
    %1563 = vmatpush1.msra.mxu0 %v1397
    %1564 = vmatprep.subr.mxu0 %v1400
    %1565 = vmatpush1.msra.mxu0 %v1399
    %1566 = vmatprep.subr.mxu0 %v1402
    %1567 = vmatpush1.msra.mxu0 %v1401
    %1568 = vmatprep.subr.mxu0 %v1404
    %1569 = vmatpush1.msra.mxu0 %v1403
    %1570 = vmatprep.subr.mxu0 %v1406
    %1571 = vmatpush1.msra.mxu0 %v1405
    %1572 = vmatprep.subr.mxu0 %v1408
    %1573 = vmatpush1.msra.mxu0 %v1407
    %1574 = vmatprep.subr.mxu0 %v1410
    %1575 = vmatpush1.msra.mxu0 %v1409
    %1576 = vmatprep.subr.mxu0 %v1412
    %1577 = vmatpush1.msra.mxu0 %v1411
    %1578 = vmatprep.subr.mxu0 %v1414
    %1579 = vmatpush1.msra.mxu0 %v1413
    %1580 = vmatprep.subr.mxu0 %v1416
    %1581 = vmatpush1.msra.mxu0 %v1415
    %1582 = vmatprep.subr.mxu0 %v1418
    %1583 = vmatpush1.msra.mxu0 %v1417
    %1584 = vmatprep.subr.mxu0 %v1420
    %1585 = vmatpush1.msra.mxu0 %v1419
    %1586 = vmatprep.subr.mxu0 %v1422
    %1587 = vmatpush1.msra.mxu0 %v1421
    %1588 = vmatprep.subr.mxu0 %v1424
    %1589 = vmatpush1.msra.mxu0 %v1423
    %1590 = vmatprep.subr.mxu0 %v1426
    %1591 = vmatpush1.msra.mxu0 %v1425
    %1592 = vmatprep.subr.mxu0 %v1428
    %1593 = vmatpush1.msra.mxu0 %v1427
    %1594 = vmatprep.subr.mxu0 %v1430
    %1595 = vmatpush1.msra.mxu0 %v1429
    %1596 = vmatprep.subr.mxu0 %v1432
    %1597 = vmatpush1.msra.mxu0 %v1431
    %1598 = vmatprep.subr.mxu0 %v1434
    %1599 = vmatpush1.msra.mxu0 %v1433
    %1600 = vmatprep.subr.mxu0 %v1436
    %1601 = vmatpush1.msra.mxu0 %v1435
    %1602 = vmatprep.subr.mxu0 %v1438
    %1603 = vmatpush1.msra.mxu0 %v1437
    %1604 = vmatprep.subr.mxu0 %v1440
    %1605 = vmatpush1.msra.mxu0 %v1439
    %1606 = vmatprep.subr.mxu0 %v1442
    %1607 = vmatpush1.msra.mxu0 %v1441
    %1608 = vmatprep.subr.mxu0 %v1444
    %1609 = vmatpush1.msra.mxu0 %v1443
    %1610 = vmatprep.subr.mxu0 %v1446
    %1611 = vmatpush1.msra.mxu0 %v1445
    %1612 = vmatprep.subr.mxu0 %v1448
    %1613 = vmatpush1.msra.mxu0 %v1447
    %1614 = vmatprep.subr.mxu0 %v1450
    %1615 = vmatpush1.msra.mxu0 %v1449
    %1616 = vmatprep.subr.mxu0 %v1452
    %1617 = vmatpush1.msra.mxu0 %v1451
    %1618 = vmatprep.subr.mxu0 %v1454
    %1619 = vmatpush1.msra.mxu0 %v1453
    %1620 = vmatprep.subr.mxu0 %v1456
    %1621 = vmatpush1.msra.mxu0 %v1455
    %1622 = vmatprep.mubr.f32.mxu0 %v1316
    %1623 = vmatmul.mubr.f32.gmra.mrb[0].mxu0 %v1315
    %v1624 = vpop.f32.mrb[0].mxu0
    %v1625 = vadd.f32 %v1536, %v1624
    %v1626 = vpop.f32.mrb[0].mxu0
    %v1627 = vadd.f32 %v1538, %v1626
    %1628 = vmatprep.mubr.f32.mxu0 %v1320
    %1629 = vmatmul.mubr.f32.gmra.mrb[0].mxu0 %v1319
    %v1630 = vpop.f32.mrb[0].mxu0
    %v1631 = vadd.f32 %v1542, %v1630
    %v1632 = vpop.f32.mrb[0].mxu0
    %v1633 = vadd.f32 %v1544, %v1632
    %1634 = vmatprep.mubr.f32.mxu0 %v1324
    %1635 = vmatmul.mubr.f32.gmra.mrb[0].mxu0 %v1323
    %v1636 = vpop.f32.mrb[0].mxu0
    %v1637 = vadd.f32 %v1548, %v1636
    %v1638 = vpop.f32.mrb[0].mxu0
    %v1639 = vadd.f32 %v1550, %v1638
    %1640 = vmatprep.mubr.f32.mxu0 %v1328
    %1641 = vmatmul.mubr.f32.gmra.mrb[0].mxu0 %v1327
    %v1642 = vpop.f32.mrb[0].mxu0
    %v1643 = vadd.f32 %v1554, %v1642
    %v1644 = vpop.f32.mrb[0].mxu0
    %v1645 = vadd.f32 %v1556, %v1644
    %1646 = vdwg.mxu0
    %v1647 = vmax.f32 %v1625, 0.0
    %v1648 = vmax.f32 %v1627, 0.0
    %v1649 = vmax.f32 %v1631, 0.0
    %v1650 = vmax.f32 %v1633, 0.0
    %v1651 = vmax.f32 %v1637, 0.0
    %v1652 = vmax.f32 %v1639, 0.0
    %v1653 = vmax.f32 %v1643, 0.0
    %v1654 = vmax.f32 %v1645, 0.0
    %v1655 = vld [vmem:[#allocation10] sm:$0xff]
    %v1656 = vld [vmem:[#allocation10 + $0x8] sm:$0xff]
    %v1657 = vld [vmem:[#allocation10 + $0x10] sm:$0xff]
    %v1658 = vld [vmem:[#allocation10 + $0x18] sm:$0xff]
    %v1659 = vld [vmem:[#allocation10 + $0x20] sm:$0xff]
    %v1660 = vld [vmem:[#allocation10 + $0x28] sm:$0xff]
    %v1661 = vld [vmem:[#allocation10 + $0x30] sm:$0xff]
    %v1662 = vld [vmem:[#allocation10 + $0x38] sm:$0xff]
    %v1663 = vld [vmem:[#allocation10 + $0x40] sm:$0xff]
    %v1664 = vld [vmem:[#allocation10 + $0x48] sm:$0xff]
    %v1665 = vld [vmem:[#allocation10 + $0x50] sm:$0xff]
    %v1666 = vld [vmem:[#allocation10 + $0x58] sm:$0xff]
    %v1667 = vld [vmem:[#allocation10 + $0x60] sm:$0xff]
    %v1668 = vld [vmem:[#allocation10 + $0x68] sm:$0xff]
    %v1669 = vld [vmem:[#allocation10 + $0x70] sm:$0xff]
    %v1670 = vld [vmem:[#allocation10 + $0x78] sm:$0xff]
    %v1671 = vld [vmem:[#allocation10 + $0x80] sm:$0xff]
    %v1672 = vld [vmem:[#allocation10 + $0x88] sm:$0xff]
    %v1673 = vld [vmem:[#allocation10 + $0x90] sm:$0xff]
    %v1674 = vld [vmem:[#allocation10 + $0x98] sm:$0xff]
    %v1675 = vld [vmem:[#allocation10 + $0xa0] sm:$0xff]
    %v1676 = vld [vmem:[#allocation10 + $0xa8] sm:$0xff]
    %v1677 = vld [vmem:[#allocation10 + $0xb0] sm:$0xff]
    %v1678 = vld [vmem:[#allocation10 + $0xb8] sm:$0xff]
    %v1679 = vld [vmem:[#allocation10 + $0xc0] sm:$0xff]
    %v1680 = vld [vmem:[#allocation10 + $0xc8] sm:$0xff]
    %v1681 = vld [vmem:[#allocation10 + $0xd0] sm:$0xff]
    %v1682 = vld [vmem:[#allocation10 + $0xd8] sm:$0xff]
    %v1683 = vld [vmem:[#allocation10 + $0xe0] sm:$0xff]
    %v1684 = vld [vmem:[#allocation10 + $0xe8] sm:$0xff]
    %v1685 = vld [vmem:[#allocation10 + $0xf0] sm:$0xff]
    %v1686 = vld [vmem:[#allocation10 + $0xf8] sm:$0xff]
    %v1687 = vld [vmem:[#allocation12] sm:$0x1]
    %v1689 = vlaneseq
    %v1690 = vshrl.u32 %v1689, 7
    %v1691 = vsub.s32 0, %v1690
    %v1692 = vrot.slane %v1687, %v1691
    %1694 = vmatprep.subr.mxu0 0.0
    %1695 = vmatpush1.msra.mxu0 %v1655
    %1696 = vmatprep.subr.mxu0 0.0
    %1697 = vmatpush1.msra.mxu0 %v1656
    %1698 = vmatprep.subr.mxu0 0.0
    %1699 = vmatpush1.msra.mxu0 %v1657
    %1700 = vmatprep.subr.mxu0 0.0
    %1701 = vmatpush1.msra.mxu0 %v1658
    %1702 = vmatprep.subr.mxu0 0.0
    %1703 = vmatpush1.msra.mxu0 %v1659
    %1704 = vmatprep.subr.mxu0 0.0
    %1705 = vmatpush1.msra.mxu0 %v1660
    %1706 = vmatprep.subr.mxu0 0.0
    %1707 = vmatpush1.msra.mxu0 %v1661
    %1708 = vmatprep.subr.mxu0 0.0
    %1709 = vmatpush1.msra.mxu0 %v1662
    %1710 = vmatprep.subr.mxu0 0.0
    %1711 = vmatpush1.msra.mxu0 %v1663
    %1712 = vmatprep.subr.mxu0 0.0
    %1713 = vmatpush1.msra.mxu0 %v1664
    %1714 = vmatprep.subr.mxu0 0.0
    %1715 = vmatpush1.msra.mxu0 %v1665
    %1716 = vmatprep.subr.mxu0 0.0
    %1717 = vmatpush1.msra.mxu0 %v1666
    %1718 = vmatprep.subr.mxu0 0.0
    %1719 = vmatpush1.msra.mxu0 %v1667
    %1720 = vmatprep.subr.mxu0 0.0
    %1721 = vmatpush1.msra.mxu0 %v1668
    %1722 = vmatprep.subr.mxu0 0.0
    %1723 = vmatpush1.msra.mxu0 %v1669
    %1724 = vmatprep.subr.mxu0 0.0
    %1725 = vmatpush1.msra.mxu0 %v1670
    %1726 = vmatprep.subr.mxu0 0.0
    %1727 = vmatpush1.msra.mxu0 %v1671
    %1728 = vmatprep.subr.mxu0 0.0
    %1729 = vmatpush1.msra.mxu0 %v1672
    %1730 = vmatprep.subr.mxu0 0.0
    %1731 = vmatpush1.msra.mxu0 %v1673
    %1732 = vmatprep.subr.mxu0 0.0
    %1733 = vmatpush1.msra.mxu0 %v1674
    %1734 = vmatprep.subr.mxu0 0.0
    %1735 = vmatpush1.msra.mxu0 %v1675
    %1736 = vmatprep.subr.mxu0 0.0
    %1737 = vmatpush1.msra.mxu0 %v1676
    %1738 = vmatprep.subr.mxu0 0.0
    %1739 = vmatpush1.msra.mxu0 %v1677
    %1740 = vmatprep.subr.mxu0 0.0
    %1741 = vmatpush1.msra.mxu0 %v1678
    %1742 = vmatprep.subr.mxu0 0.0
    %1743 = vmatpush1.msra.mxu0 %v1679
    %1744 = vmatprep.subr.mxu0 0.0
    %1745 = vmatpush1.msra.mxu0 %v1680
    %1746 = vmatprep.subr.mxu0 0.0
    %1747 = vmatpush1.msra.mxu0 %v1681
    %1748 = vmatprep.subr.mxu0 0.0
    %1749 = vmatpush1.msra.mxu0 %v1682
    %1750 = vmatprep.subr.mxu0 0.0
    %1751 = vmatpush1.msra.mxu0 %v1683
    %1752 = vmatprep.subr.mxu0 0.0
    %1753 = vmatpush1.msra.mxu0 %v1684
    %1754 = vmatprep.subr.mxu0 0.0
    %1755 = vmatpush1.msra.mxu0 %v1685
    %1756 = vmatprep.subr.mxu0 0.0
    %1757 = vmatpush1.msra.mxu0 %v1686
    %1758 = vmatprep.mubr.f32.mxu0 %v1648
    %1759 = vmatmul.mubr.f32.gmra.mrb[0].mxu0 %v1647
    %v1760 = vpop.f32.mrb[0].mxu0
    %v1761 = vadd.f32 %v1692, %v1760
    %v1762 = vpop.f32.mrb[0].mxu0
    %1763 = vmatprep.mubr.f32.mxu0 %v1650
    %1764 = vmatmul.mubr.f32.gmra.mrb[0].mxu0 %v1649
    %v1765 = vpop.f32.mrb[0].mxu0
    %v1766 = vadd.f32 %v1692, %v1765
    %v1767 = vpop.f32.mrb[0].mxu0
    %1768 = vmatprep.mubr.f32.mxu0 %v1652
    %1769 = vmatmul.mubr.f32.gmra.mrb[0].mxu0 %v1651
    %v1770 = vpop.f32.mrb[0].mxu0
    %v1771 = vadd.f32 %v1692, %v1770
    %v1772 = vpop.f32.mrb[0].mxu0
    %1773 = vmatprep.mubr.f32.mxu0 %v1654
    %1774 = vmatmul.mubr.f32.gmra.mrb[0].mxu0 %v1653
    %v1775 = vpop.f32.mrb[0].mxu0
    %v1776 = vadd.f32 %v1692, %v1775
    %v1777 = vpop.f32.mrb[0].mxu0
    %1778 = vdwg.mxu0
    %v1779 = vmax.f32 %v1761, 0.0
    %v1780 = vmax.f32 %v1766, 0.0
    %v1781 = vmax.f32 %v1771, 0.0
    %v1782 = vmax.f32 %v1776, 0.0
    %v1783 = vld [vmem:[#allocation13] sm:$0xff]
    %v1784 = vld [vmem:[#allocation13 + $0x8] sm:$0xff]
    %v1785 = vld [vmem:[#allocation13 + $0x10] sm:$0xff]
    %v1786 = vld [vmem:[#allocation13 + $0x18] sm:$0xff]
    %v1787 = vld [vmem:[#allocation13 + $0x20] sm:$0xff]
    %v1788 = vld [vmem:[#allocation13 + $0x28] sm:$0xff]
    %v1789 = vld [vmem:[#allocation13 + $0x30] sm:$0xff]
    %v1790 = vld [vmem:[#allocation13 + $0x38] sm:$0xff]
    %v1791 = vld [vmem:[#allocation13 + $0x40] sm:$0xff]
    %v1792 = vld [vmem:[#allocation13 + $0x48] sm:$0xff]
    %v1793 = vld [vmem:[#allocation13 + $0x50] sm:$0xff]
    %v1794 = vld [vmem:[#allocation13 + $0x58] sm:$0xff]
    %v1795 = vld [vmem:[#allocation13 + $0x60] sm:$0xff]
    %v1796 = vld [vmem:[#allocation13 + $0x68] sm:$0xff]
    %v1797 = vld [vmem:[#allocation13 + $0x70] sm:$0xff]
    %v1798 = vld [vmem:[#allocation13 + $0x78] sm:$0xff]
    %v1799 = vld [vmem:[#allocation15] sm:$0x1]
    %v1801 = vlaneseq
    %v1802 = vshrl.u32 %v1801, 7
    %v1803 = vsub.s32 0, %v1802
    %v1804 = vrot.slane %v1799, %v1803
    %1806 = vmatprep.subr.mxu0 0.0
    %1807 = vmatpush1.msra.mxu0 %v1783
    %1808 = vmatprep.subr.mxu0 0.0
    %1809 = vmatpush1.msra.mxu0 %v1784
    %1810 = vmatprep.subr.mxu0 0.0
    %1811 = vmatpush1.msra.mxu0 %v1785
    %1812 = vmatprep.subr.mxu0 0.0
    %1813 = vmatpush1.msra.mxu0 %v1786
    %1814 = vmatprep.subr.mxu0 0.0
    %1815 = vmatpush1.msra.mxu0 %v1787
    %1816 = vmatprep.subr.mxu0 0.0
    %1817 = vmatpush1.msra.mxu0 %v1788
    %1818 = vmatprep.subr.mxu0 0.0
    %1819 = vmatpush1.msra.mxu0 %v1789
    %1820 = vmatprep.subr.mxu0 0.0
    %1821 = vmatpush1.msra.mxu0 %v1790
    %1822 = vmatprep.subr.mxu0 0.0
    %1823 = vmatpush1.msra.mxu0 %v1791
    %1824 = vmatprep.subr.mxu0 0.0
    %1825 = vmatpush1.msra.mxu0 %v1792
    %1826 = vmatprep.subr.mxu0 0.0
    %1827 = vmatpush1.msra.mxu0 %v1793
    %1828 = vmatprep.subr.mxu0 0.0
    %1829 = vmatpush1.msra.mxu0 %v1794
    %1830 = vmatprep.subr.mxu0 0.0
    %1831 = vmatpush1.msra.mxu0 %v1795
    %1832 = vmatprep.subr.mxu0 0.0
    %1833 = vmatpush1.msra.mxu0 %v1796
    %1834 = vmatprep.subr.mxu0 0.0
    %1835 = vmatpush1.msra.mxu0 %v1797
    %1836 = vmatprep.subr.mxu0 0.0
    %1837 = vmatpush1.msra.mxu0 %v1798
    %1838 = vmatprep.subr.mxu0 0.0
    %1839 = vmatpush1.msra.mxu0 0.0
    %1840 = vmatprep.subr.mxu0 0.0
    %1841 = vmatpush1.msra.mxu0 0.0
    %1842 = vmatprep.subr.mxu0 0.0
    %1843 = vmatpush1.msra.mxu0 0.0
    %1844 = vmatprep.subr.mxu0 0.0
    %1845 = vmatpush1.msra.mxu0 0.0
    %1846 = vmatprep.subr.mxu0 0.0
    %1847 = vmatpush1.msra.mxu0 0.0
    %1848 = vmatprep.subr.mxu0 0.0
    %1849 = vmatpush1.msra.mxu0 0.0
    %1850 = vmatprep.subr.mxu0 0.0
    %1851 = vmatpush1.msra.mxu0 0.0
    %1852 = vmatprep.subr.mxu0 0.0
    %1853 = vmatpush1.msra.mxu0 0.0
    %1854 = vmatprep.subr.mxu0 0.0
    %1855 = vmatpush1.msra.mxu0 0.0
    %1856 = vmatprep.subr.mxu0 0.0
    %1857 = vmatpush1.msra.mxu0 0.0
    %1858 = vmatprep.subr.mxu0 0.0
    %1859 = vmatpush1.msra.mxu0 0.0
    %1860 = vmatprep.subr.mxu0 0.0
    %1861 = vmatpush1.msra.mxu0 0.0
    %1862 = vmatprep.subr.mxu0 0.0
    %1863 = vmatpush1.msra.mxu0 0.0
    %1864 = vmatprep.subr.mxu0 0.0
    %1865 = vmatpush1.msra.mxu0 0.0
    %1866 = vmatprep.subr.mxu0 0.0
    %1867 = vmatpush1.msra.mxu0 0.0
    %1868 = vmatprep.subr.mxu0 0.0
    %1869 = vmatpush1.msra.mxu0 0.0
    %1870 = vmatprep.mubr.f32.mxu0 0.0
    %1871 = vmatmul.mubr.f32.gmra.mrb[0].mxu0 %v1779
    %v1872 = vpop.f32.mrb[0].mxu0
    %v1873 = vadd.f32 %v1804, %v1872
    %v1874 = vpop.f32.mrb[0].mxu0
    %1875 = vmatprep.mubr.f32.mxu0 0.0
    %1876 = vmatmul.mubr.f32.gmra.mrb[0].mxu0 %v1780
    %v1877 = vpop.f32.mrb[0].mxu0
    %v1878 = vadd.f32 %v1804, %v1877
    %v1879 = vpop.f32.mrb[0].mxu0
    %1880 = vmatprep.mubr.f32.mxu0 0.0
    %1881 = vmatmul.mubr.f32.gmra.mrb[0].mxu0 %v1781
    %v1882 = vpop.f32.mrb[0].mxu0
    %v1883 = vadd.f32 %v1804, %v1882
    %v1884 = vpop.f32.mrb[0].mxu0
    %1885 = vmatprep.mubr.f32.mxu0 0.0
    %1886 = vmatmul.mubr.f32.gmra.mrb[0].mxu0 %v1782
    %v1887 = vpop.f32.mrb[0].mxu0
    %v1888 = vadd.f32 %v1804, %v1887
    %v1889 = vpop.f32.mrb[0].mxu0
    %1890 = vdwg.mxu0
    %vm1891 = vcmask 80896
    %1892 = vst.msk [vmem:[%s9] sm:$0xff] %vm1891, %v1873
    %1893 = vst.msk [vmem:[%s9 + $0x8] sm:$0xff] %vm1891, %v1878
    %1894 = vst.msk [vmem:[%s9 + $0x10] sm:$0xff] %vm1891, %v1883
    %1895 = vst.msk [vmem:[%s9 + $0x18] sm:$0xff] %vm1891, %v1888
    // Predicated region
    $region74: #{tpu_custom_call.1} parent=1 // pred_check
      _
    $region75: #{tpu_custom_call.1} parent=1 // pred_check_branch
      %1897 = sbr.rel (0) target = $region77
    $region76: #{tpu_custom_call.1} parent=1 // pred_region
      _
    $region77: #{tpu_custom_call.1} parent=1 // pred_fallthru
      _
    // Predicated region
    $region78: #{tpu_custom_call.1} parent=1 // pred_check
      _
    $region79: #{tpu_custom_call.1} parent=1 // pred_check_branch
      %1899 = sbr.rel (0) target = $region81
    $region80: #{tpu_custom_call.1} parent=1 // pred_region
      _
    $region81: #{tpu_custom_call.1} parent=1 // pred_fallthru
      _
    %1900 = vsyncpa [#allocation3], 1
    %1901 = vsyncpa [#allocation5], 1
    %1902 = vsyncpa [#allocation8], 1
    %1903 = vsyncpa [#allocation11], 1
    %1904 = vsyncpa [#allocation14], 1

</llo_original>
